<compile_context>
chip_gen: v5e
topology: v5e:2x2
jax: 0.10.0
libtpu: 0.0.40
codegen_flags: <defaults>
</compile_context>

<pallas_src>
import jax
import jax.numpy as jnp
import numpy as np
from jax.experimental import pallas as pl
from jax.experimental.pallas import tpu as pltpu

EPS = 1e-5


# ------------------------------ Pallas kernel ------------------------------- #

def _bottleneck_s2_kernel(xp_ref, w1_ref, b1_ref, w2_ref, b2_ref,
                          w3_ref, wsc_ref, b3sc_ref,
                          o_ref, h1p_ref):
    """Fully fused bottleneck (stride=2, projection shortcut) for one image.

    xp_ref   : (4, Hh*Wh, Cin) bf16  stride-2 parity planes of the input image,
               plane order k=0..3 = (ee, eo, oe, oo) of the *unpadded* coords.
    w1_ref   : (Cin, P)  bf16        conv1 1x1 weight, BN1 scale folded in
    w2_ref   : (9, P, P) bf16        conv2 3x3 taps (k = ki*3+kj), BN2 scale folded
    w3_ref   : (P, 4P)   bf16        conv3 1x1 weight, BN3 scale folded in
    wsc_ref  : (Cin, 4P) bf16        shortcut 1x1 weight, BN_sc scale folded in
    b1/b2    : (1, P)    f32         folded BN biases
    b3sc_ref : (1, 4P)   f32         folded (bn3 + bn_sc) bias, added once
    o_ref    : (Hh*Wh, 4P) f32       output block (flattened spatial)
    h1p_ref  : (4, Hh+1, Wh+1, P) f32 VMEM scratch: zero-padded parity planes of
               the conv1 output (plane index = 2*row_parity + col_parity of the
               zero-padded coordinate).
    """
    _, hp1, wp1, P = h1p_ref.shape
    Hh, Wh = hp1 - 1, wp1 - 1            # conv2/shortcut output spatial = H/2, W/2
    M2 = Hh * Wh

    # ---- conv1 (1x1) + bn1 + relu on all four parity planes: ONE matmul ---- #
    xall = xp_ref[...].reshape(4 * M2, xp_ref.shape[-1])          # (4*M2, Cin) bf16
    h1 = jnp.dot(xall, w1_ref[...], preferred_element_type=jnp.float32)
    h1 = jnp.maximum(h1 + b1_ref[...], 0.0).reshape(4, Hh, Wh, P)  # f32

    # ---- scatter into zero-padded parity planes (conv2's input) ------------ #
    # padded coord (p, q) = (unpadded + 1); plane = 2*(p%2) + (q%2).
    # Never-written border rows/cols stay zero == conv2's zero padding.
    h1p_ref[...] = jnp.zeros(h1p_ref.shape, h1p_ref.dtype)
    h1p_ref[3, :Hh, :Wh, :] = h1[0]      # x (even,even) -> padded parity (odd, odd)
    h1p_ref[2, :Hh, 1:, :] = h1[1]       # x (even,odd ) -> padded parity (odd, even)
    h1p_ref[1, 1:, :Wh, :] = h1[2]       # x (odd ,even) -> padded parity (even, odd)
    h1p_ref[0, 1:, 1:, :] = h1[3]        # x (odd ,odd ) -> padded parity (even, even)

    # ---- conv2 (3x3, stride 2, pad 1): 9 accumulated matmuls ---------------- #
    # Tap (ki, kj) reads padded position (2*oi+ki, 2*oj+kj) == plane
    # (ki%2, kj%2) shifted by (ki//2, kj//2) -- always a contiguous window.
    acc = jnp.zeros((M2, P), jnp.float32)
    for ki in range(3):
        for kj in range(3):
            plane = (ki % 2) * 2 + (kj % 2)
            dr, dc = ki // 2, kj // 2
            tap = h1p_ref[plane, dr:dr + Hh, dc:dc + Wh, :]
            tap = tap.reshape(M2, P).astype(jnp.bfloat16)
            acc = acc + jnp.dot(tap, w2_ref[ki * 3 + kj],
                                preferred_element_type=jnp.float32)
    h2 = jnp.maximum(acc + b2_ref[...], 0.0).astype(jnp.bfloat16)   # (M2, P)

    # ---- conv3 (1x1) + bn3, fused with projection shortcut + add + relu ----- #
    # Shortcut 1x1 stride-2 conv on x == 1x1 conv on the (even,even) parity plane.
    y = jnp.dot(h2, w3_ref[...], preferred_element_type=jnp.float32)
    y = y + jnp.dot(xp_ref[0], wsc_ref[...], preferred_element_type=jnp.float32)
    o_ref[...] = jnp.maximum(y + b3sc_ref[...], 0.0).astype(o_ref.dtype)


# ------------------------------ glue / wrapper ------------------------------ #

def _fold_bn(gamma, beta, rmean, rvar):
    scale = gamma / jnp.sqrt(rvar + EPS)
    bias = beta - rmean * scale
    return scale, bias


def bottleneck_forward(x_nchw, params, stride):
    """Pallas implementation of Bottleneck.forward (grad_proj=False path)."""
    if stride != 2:
        # TODO(synk): stride==1 / identity-shortcut variant not implemented here.
        raise NotImplementedError("fused Pallas bottleneck implements stride=2 only")

    x = jnp.transpose(x_nchw, (0, 2, 3, 1)).astype(jnp.float32)     # -> NHWC
    N, H, W, Cin = x.shape
    assert H % 2 == 0 and W % 2 == 0, "stride=2 path expects even spatial dims"
    Hh, Wh = H // 2, W // 2                                         # output spatial
    M2 = Hh * Wh

    s1, b1 = _fold_bn(*params["bn1"])
    s2, b2 = _fold_bn(*params["bn2"])
    s3, b3 = _fold_bn(*params["bn3"])
    ssc, bsc = _fold_bn(*params["bn_sc"])

    # Conv weights as (Cin, Cout) matrices with the BN scale folded into the
    # output-channel axis (kernel then only adds the folded bias).
    w1m = (params["w1"][:, :, 0, 0].T * s1[None, :]).astype(jnp.bfloat16)
    P = w1m.shape[1]
    w2m = jnp.transpose(params["w2"], (2, 3, 1, 0)).reshape(9, P, P)   # (kh,kw,Ci,Co)
    w2m = (w2m * s2[None, None, :]).astype(jnp.bfloat16)
    w3m = (params["w3"][:, :, 0, 0].T * s3[None, :]).astype(jnp.bfloat16)
    C3 = w3m.shape[1]
    wscm = (params["w_sc"][:, :, 0, 0].T * ssc[None, :]).astype(jnp.bfloat16)

    b1 = b1.reshape(1, P).astype(jnp.float32)
    b2 = b2.reshape(1, P).astype(jnp.float32)
    b3sc = (b3 + bsc).reshape(1, C3).astype(jnp.float32)    # added once in kernel

    # Stride-2 parity planes of the input, stacked into one (N, 4, Hh*Wh, Cin)
    # array (pure layout slicing in the wrapper). Plane 0 (even, even) doubles as
    # the input of the stride-2 1x1 projection shortcut, so x is read exactly once.
    xb = x.astype(jnp.bfloat16)

    def plane(r0, c0):
        return xb[:, r0::2, c0::2, :].reshape(N, M2, Cin)

    xp = jnp.stack([plane(0, 0), plane(0, 1), plane(1, 0), plane(1, 1)], axis=1)

    img_spec = pl.BlockSpec((None, 4, M2, Cin), lambda n: (n, 0, 0, 0))
    out_spec = pl.BlockSpec((None, M2, C3), lambda n: (n, 0, 0))

    def const_spec(shape):
        # Constant index map -> block fetched once; small enough that the default
        # double-buffering is irrelevant at these sizes (see TODO at top of file).
        zeros = (0,) * len(shape)
        return pl.BlockSpec(shape, lambda n, _z=zeros: _z)

    out2d = pl.pallas_call(
        _bottleneck_s2_kernel,
        out_shape=jax.ShapeDtypeStruct((N, M2, C3), jnp.float32),
        grid_spec=pltpu.PrefetchScalarGridSpec(
            num_scalar_prefetch=0,
            grid=(N,),
            in_specs=[
                img_spec,
                const_spec((Cin, P)), const_spec((1, P)),
                const_spec((9, P, P)), const_spec((1, P)),
                const_spec((P, C3)), const_spec((Cin, C3)), const_spec((1, C3)),
            ],
            out_specs=out_spec,
            scratch_shapes=[pltpu.VMEM((4, Hh + 1, Wh + 1, P), jnp.float32)],
        ),
        compiler_params=pltpu.CompilerParams(
            dimension_semantics=("parallel",)),   # v7x: images sharded over 2 TCs
    )(xp, w1m, b1, w2m, b2, w3m, wscm, b3sc)

    out = out2d.reshape(N, Hh, Wh, C3)
    return jnp.transpose(out, (0, 3, 1, 2))       # back to NCHW


bottleneck_forward_jit = jax.jit(bottleneck_forward, static_argnums=(2,))


# ------------------------------ reference (JAX) ------------------------------ #

def _ref_conv(x_nhwc, w_oihw, stride, pad):
    return jax.lax.conv_general_dilated(
        x_nhwc, jnp.transpose(w_oihw, (2, 3, 1, 0)),
        window_strides=(stride, stride), padding=[(pad, pad), (pad, pad)],
        dimension_numbers=("NHWC", "HWIO", "NHWC"))


def _ref_bn(x, bn):
    gamma, beta, rmean, rvar = bn
    return (x - rmean) / jnp.sqrt(rvar + EPS) * gamma + beta


def bottleneck_reference(x_nchw, params, stride):
    x = jnp.transpose(x_nchw, (0, 2, 3, 1)).astype(jnp.float32)
    out = jax.nn.relu(_ref_bn(_ref_conv(x, params["w1"], 1, 0), params["bn1"]))
    out = jax.nn.relu(_ref_bn(_ref_conv(out, params["w2"], stride, 1), params["bn2"]))
    out = _ref_bn(_ref_conv(out, params["w3"], 1, 0), params["bn3"])
    short = _ref_bn(_ref_conv(x, params["w_sc"], stride, 0), params["bn_sc"])
    out = jax.nn.relu(out + short)
    return jnp.transpose(out, (0, 3, 1, 2))


# ---------------------------------- main ------------------------------------ #

if __name__ == "__main__":
    key = jax.random.PRNGKey(0)
    N, in_planes, H, W = 2, 4, 16, 16
    planes, stride = 4, 2
    expansion = 4

    keys = jax.random.split(key, 16)

    def bn_params(k, c):
        k1, k2, k3, k4 = jax.random.split(k, 4)
        gamma = 1.0 + 0.1 * jax.random.normal(k1, (c,), jnp.float32)
        beta = 0.1 * jax.random.normal(k2, (c,), jnp.float32)
        rmean = 0.1 * jax.random.normal(k3, (c,), jnp.float32)
        rvar = jnp.abs(1.0 + 0.1 * jax.random.normal(k4, (c,), jnp.float32))
        return (gamma, beta, rmean, rvar)

    params = {
        "w1": 0.2 * jax.random.normal(keys[0], (planes, in_planes, 1, 1), jnp.float32),
        "w2": 0.2 * jax.random.normal(keys[1], (planes, planes, 3, 3), jnp.float32),
        "w3": 0.2 * jax.random.normal(keys[2], (expansion * planes, planes, 1, 1), jnp.float32),
        "w_sc": 0.2 * jax.random.normal(keys[3], (expansion * planes, in_planes, 1, 1), jnp.float32),
        "bn1": bn_params(keys[4], planes),
        "bn2": bn_params(keys[5], planes),
        "bn3": bn_params(keys[6], expansion * planes),
        "bn_sc": bn_params(keys[7], expansion * planes),
    }

    x = jax.random.normal(keys[8], (N, in_planes, H, W), jnp.float32)

    out = jax.block_until_ready(bottleneck_forward_jit(x, params, stride))
    ref = jax.block_until_ready(bottleneck_reference(x, params, stride))

    assert out.shape == (N, expansion * planes, H // stride, W // stride), out.shape
    # bf16 matmul inputs (f32 accumulation) vs. an all-f32 reference -> relaxed tol.
    np.testing.assert_allclose(np.asarray(out), np.asarray(ref), rtol=3e-2, atol=3e-2)
    print("KERNEL_OK")
</pallas_src>

<mosaic_0001>
module attributes {stable_mosaic.version = 11 : i64} {
  func.func @_bottleneck_s2_kernel(%arg0: i32, %arg1: memref<1x4x64x4xbf16, #tpu.memory_space<vmem>>, %arg2: memref<4x4xbf16, #tpu.memory_space<vmem>>, %arg3: memref<1x4xf32, #tpu.memory_space<vmem>>, %arg4: memref<9x4x4xbf16, #tpu.memory_space<vmem>>, %arg5: memref<1x4xf32, #tpu.memory_space<vmem>>, %arg6: memref<4x16xbf16, #tpu.memory_space<vmem>>, %arg7: memref<4x16xbf16, #tpu.memory_space<vmem>>, %arg8: memref<1x16xf32, #tpu.memory_space<vmem>>, %arg9: memref<1x64x16xf32, #tpu.memory_space<vmem>>, %arg10: memref<4x9x9x4xf32, #tpu.memory_space<vmem>>) attributes {dimension_semantics = [#tpu.dimension_semantics<parallel>], iteration_bounds = array<i64: 2>, scalar_prefetch = 0 : i64, scratch_operands = 1 : i64, tpu.core_type = #tpu.core_type<tc>, window_params = [{transform_indices = @transform_0, window_bounds = array<i64: 1, 4, 64, 4>}, {pipeline_mode = #tpu.pipeline_mode<synchronous>, transform_indices = @transform_1, window_bounds = array<i64: 4, 4>}, {pipeline_mode = #tpu.pipeline_mode<synchronous>, transform_indices = @transform_2, window_bounds = array<i64: 1, 4>}, {pipeline_mode = #tpu.pipeline_mode<synchronous>, transform_indices = @transform_3, window_bounds = array<i64: 9, 4, 4>}, {pipeline_mode = #tpu.pipeline_mode<synchronous>, transform_indices = @transform_4, window_bounds = array<i64: 1, 4>}, {pipeline_mode = #tpu.pipeline_mode<synchronous>, transform_indices = @transform_5, window_bounds = array<i64: 4, 16>}, {pipeline_mode = #tpu.pipeline_mode<synchronous>, transform_indices = @transform_6, window_bounds = array<i64: 4, 16>}, {pipeline_mode = #tpu.pipeline_mode<synchronous>, transform_indices = @transform_7, window_bounds = array<i64: 1, 16>}, {transform_indices = @transform_8, window_bounds = array<i64: 1, 64, 16>}]} {
    %c0 = arith.constant 0 : index
    %c0_0 = arith.constant 0 : index
    %c0_1 = arith.constant 0 : index
    %c0_2 = arith.constant 0 : index
    %0 = vector.load %arg1[%c0, %c0_0, %c0_1, %c0_2] : memref<1x4x64x4xbf16, #tpu.memory_space<vmem>>, vector<1x4x64x4xbf16>
    %1 = vector.shape_cast %0 : vector<1x4x64x4xbf16> to vector<4x64x4xbf16>
    %2 = vector.shape_cast %1 : vector<4x64x4xbf16> to vector<256x4xbf16>
    %c0_3 = arith.constant 0 : index
    %c0_4 = arith.constant 0 : index
    %3 = vector.load %arg2[%c0_3, %c0_4] : memref<4x4xbf16, #tpu.memory_space<vmem>>, vector<4x4xbf16>
    %cst = arith.constant dense<0.000000e+00> : vector<256x4xf32>
    %4 = tpu.matmul %2, %3, %cst {dimension_numbers = #tpu.dot_dimension_numbers<[1], [0], [0], [1], [0, 0, 1, 1], [], []>} : vector<256x4xbf16>, vector<4x4xbf16>, vector<256x4xf32> -> vector<256x4xf32>
    %c0_5 = arith.constant 0 : index
    %c0_6 = arith.constant 0 : index
    %5 = vector.load %arg3[%c0_5, %c0_6] : memref<1x4xf32, #tpu.memory_space<vmem>>, vector<1x4xf32>
    %6 = vector.broadcast %5 : vector<1x4xf32> to vector<256x4xf32>
    %7 = arith.addf %4, %6 : vector<256x4xf32>
    %cst_7 = arith.constant 0.000000e+00 : f32
    %8 = vector.broadcast %cst_7 : f32 to vector<256x4xf32>
    %9 = arith.maximumf %7, %8 : vector<256x4xf32>
    %10 = vector.shape_cast %9 : vector<256x4xf32> to vector<4x8x8x4xf32>
    %cst_8 = arith.constant 0.000000e+00 : f32
    %11 = vector.broadcast %cst_8 : f32 to vector<4x9x9x4xf32>
    %c0_9 = arith.constant 0 : index
    %c0_10 = arith.constant 0 : index
    %c0_11 = arith.constant 0 : index
    %c0_12 = arith.constant 0 : index
    %12 = vector.load %arg10[%c0_9, %c0_10, %c0_11, %c0_12] : memref<4x9x9x4xf32, #tpu.memory_space<vmem>>, vector<4x9x9x4xf32>
    tpu.vector_store %arg10[%c0_9, %c0_10, %c0_11, %c0_12], %11 {strides = array<i32>} : memref<4x9x9x4xf32, #tpu.memory_space<vmem>>, vector<4x9x9x4xf32>,
    %13 = vector.extract_strided_slice %10 {offsets = [0, 0, 0, 0], sizes = [1, 8, 8, 4], strides = [1, 1, 1, 1]} : vector<4x8x8x4xf32> to vector<1x8x8x4xf32>
    %14 = vector.shape_cast %13 : vector<1x8x8x4xf32> to vector<8x8x4xf32>
    %c3 = arith.constant 3 : index
    %c0_13 = arith.constant 0 : index
    %c0_14 = arith.constant 0 : index
    %c0_15 = arith.constant 0 : index
    %15 = vector.load %arg10[%c3, %c0_13, %c0_14, %c0_15] : memref<4x9x9x4xf32, #tpu.memory_space<vmem>>, vector<1x8x8x4xf32>
    %16 = vector.shape_cast %15 : vector<1x8x8x4xf32> to vector<8x8x4xf32>
    %17 = vector.shape_cast %14 : vector<8x8x4xf32> to vector<1x8x8x4xf32>
    tpu.vector_store %arg10[%c3, %c0_13, %c0_14, %c0_15], %17 {strides = array<i32>} : memref<4x9x9x4xf32, #tpu.memory_space<vmem>>, vector<1x8x8x4xf32>,
    %18 = vector.extract_strided_slice %10 {offsets = [1, 0, 0, 0], sizes = [1, 8, 8, 4], strides = [1, 1, 1, 1]} : vector<4x8x8x4xf32> to vector<1x8x8x4xf32>
    %19 = vector.shape_cast %18 : vector<1x8x8x4xf32> to vector<8x8x4xf32>
    %c2 = arith.constant 2 : index
    %c0_16 = arith.constant 0 : index
    %c1 = arith.constant 1 : index
    %c0_17 = arith.constant 0 : index
    %20 = vector.load %arg10[%c2, %c0_16, %c1, %c0_17] : memref<4x9x9x4xf32, #tpu.memory_space<vmem>>, vector<1x8x8x4xf32>
    %21 = vector.shape_cast %20 : vector<1x8x8x4xf32> to vector<8x8x4xf32>
    %22 = vector.shape_cast %19 : vector<8x8x4xf32> to vector<1x8x8x4xf32>
    tpu.vector_store %arg10[%c2, %c0_16, %c1, %c0_17], %22 {strides = array<i32>} : memref<4x9x9x4xf32, #tpu.memory_space<vmem>>, vector<1x8x8x4xf32>,
    %23 = vector.extract_strided_slice %10 {offsets = [2, 0, 0, 0], sizes = [1, 8, 8, 4], strides = [1, 1, 1, 1]} : vector<4x8x8x4xf32> to vector<1x8x8x4xf32>
    %24 = vector.shape_cast %23 : vector<1x8x8x4xf32> to vector<8x8x4xf32>
    %c1_18 = arith.constant 1 : index
    %c1_19 = arith.constant 1 : index
    %c0_20 = arith.constant 0 : index
    %c0_21 = arith.constant 0 : index
    %25 = vector.load %arg10[%c1_18, %c1_19, %c0_20, %c0_21] : memref<4x9x9x4xf32, #tpu.memory_space<vmem>>, vector<1x8x8x4xf32>
    %26 = vector.shape_cast %25 : vector<1x8x8x4xf32> to vector<8x8x4xf32>
    %27 = vector.shape_cast %24 : vector<8x8x4xf32> to vector<1x8x8x4xf32>
    tpu.vector_store %arg10[%c1_18, %c1_19, %c0_20, %c0_21], %27 {strides = array<i32>} : memref<4x9x9x4xf32, #tpu.memory_space<vmem>>, vector<1x8x8x4xf32>,
    %28 = vector.extract_strided_slice %10 {offsets = [3, 0, 0, 0], sizes = [1, 8, 8, 4], strides = [1, 1, 1, 1]} : vector<4x8x8x4xf32> to vector<1x8x8x4xf32>
    %29 = vector.shape_cast %28 : vector<1x8x8x4xf32> to vector<8x8x4xf32>
    %c0_22 = arith.constant 0 : index
    %c1_23 = arith.constant 1 : index
    %c1_24 = arith.constant 1 : index
    %c0_25 = arith.constant 0 : index
    %30 = vector.load %arg10[%c0_22, %c1_23, %c1_24, %c0_25] : memref<4x9x9x4xf32, #tpu.memory_space<vmem>>, vector<1x8x8x4xf32>
    %31 = vector.shape_cast %30 : vector<1x8x8x4xf32> to vector<8x8x4xf32>
    %32 = vector.shape_cast %29 : vector<8x8x4xf32> to vector<1x8x8x4xf32>
    tpu.vector_store %arg10[%c0_22, %c1_23, %c1_24, %c0_25], %32 {strides = array<i32>} : memref<4x9x9x4xf32, #tpu.memory_space<vmem>>, vector<1x8x8x4xf32>,
    %cst_26 = arith.constant 0.000000e+00 : f32
    %33 = vector.broadcast %cst_26 : f32 to vector<64x4xf32>
    %c0_27 = arith.constant 0 : index
    %c0_28 = arith.constant 0 : index
    %c0_29 = arith.constant 0 : index
    %c0_30 = arith.constant 0 : index
    %34 = vector.load %arg10[%c0_27, %c0_28, %c0_29, %c0_30] : memref<4x9x9x4xf32, #tpu.memory_space<vmem>>, vector<1x8x8x4xf32>
    %35 = vector.shape_cast %34 : vector<1x8x8x4xf32> to vector<8x8x4xf32>
    %36 = vector.shape_cast %35 : vector<8x8x4xf32> to vector<64x4xf32>
    %37 = arith.truncf %36 : vector<64x4xf32> to vector<64x4xbf16>
    %c0_31 = arith.constant 0 : index
    %c0_32 = arith.constant 0 : index
    %c0_33 = arith.constant 0 : index
    %38 = vector.load %arg4[%c0_31, %c0_32, %c0_33] : memref<9x4x4xbf16, #tpu.memory_space<vmem>>, vector<1x4x4xbf16>
    %39 = vector.shape_cast %38 : vector<1x4x4xbf16> to vector<4x4xbf16>
    %cst_34 = arith.constant dense<0.000000e+00> : vector<64x4xf32>
    %40 = tpu.matmul %37, %39, %cst_34 {dimension_numbers = #tpu.dot_dimension_numbers<[1], [0], [0], [1], [0, 0, 1, 1], [], []>} : vector<64x4xbf16>, vector<4x4xbf16>, vector<64x4xf32> -> vector<64x4xf32>
    %41 = arith.addf %33, %40 : vector<64x4xf32>
    %c1_35 = arith.constant 1 : index
    %c0_36 = arith.constant 0 : index
    %c0_37 = arith.constant 0 : index
    %c0_38 = arith.constant 0 : index
    %42 = vector.load %arg10[%c1_35, %c0_36, %c0_37, %c0_38] : memref<4x9x9x4xf32, #tpu.memory_space<vmem>>, vector<1x8x8x4xf32>
    %43 = vector.shape_cast %42 : vector<1x8x8x4xf32> to vector<8x8x4xf32>
    %44 = vector.shape_cast %43 : vector<8x8x4xf32> to vector<64x4xf32>
    %45 = arith.truncf %44 : vector<64x4xf32> to vector<64x4xbf16>
    %c1_39 = arith.constant 1 : index
    %c0_40 = arith.constant 0 : index
    %c0_41 = arith.constant 0 : index
    %46 = vector.load %arg4[%c1_39, %c0_40, %c0_41] : memref<9x4x4xbf16, #tpu.memory_space<vmem>>, vector<1x4x4xbf16>
    %47 = vector.shape_cast %46 : vector<1x4x4xbf16> to vector<4x4xbf16>
    %cst_42 = arith.constant dense<0.000000e+00> : vector<64x4xf32>
    %48 = tpu.matmul %45, %47, %cst_42 {dimension_numbers = #tpu.dot_dimension_numbers<[1], [0], [0], [1], [0, 0, 1, 1], [], []>} : vector<64x4xbf16>, vector<4x4xbf16>, vector<64x4xf32> -> vector<64x4xf32>
    %49 = arith.addf %41, %48 : vector<64x4xf32>
    %c0_43 = arith.constant 0 : index
    %c0_44 = arith.constant 0 : index
    %c1_45 = arith.constant 1 : index
    %c0_46 = arith.constant 0 : index
    %50 = vector.load %arg10[%c0_43, %c0_44, %c1_45, %c0_46] : memref<4x9x9x4xf32, #tpu.memory_space<vmem>>, vector<1x8x8x4xf32>
    %51 = vector.shape_cast %50 : vector<1x8x8x4xf32> to vector<8x8x4xf32>
    %52 = vector.shape_cast %51 : vector<8x8x4xf32> to vector<64x4xf32>
    %53 = arith.truncf %52 : vector<64x4xf32> to vector<64x4xbf16>
    %c2_47 = arith.constant 2 : index
    %c0_48 = arith.constant 0 : index
    %c0_49 = arith.constant 0 : index
    %54 = vector.load %arg4[%c2_47, %c0_48, %c0_49] : memref<9x4x4xbf16, #tpu.memory_space<vmem>>, vector<1x4x4xbf16>
    %55 = vector.shape_cast %54 : vector<1x4x4xbf16> to vector<4x4xbf16>
    %cst_50 = arith.constant dense<0.000000e+00> : vector<64x4xf32>
    %56 = tpu.matmul %53, %55, %cst_50 {dimension_numbers = #tpu.dot_dimension_numbers<[1], [0], [0], [1], [0, 0, 1, 1], [], []>} : vector<64x4xbf16>, vector<4x4xbf16>, vector<64x4xf32> -> vector<64x4xf32>
    %57 = arith.addf %49, %56 : vector<64x4xf32>
    %c2_51 = arith.constant 2 : index
    %c0_52 = arith.constant 0 : index
    %c0_53 = arith.constant 0 : index
    %c0_54 = arith.constant 0 : index
    %58 = vector.load %arg10[%c2_51, %c0_52, %c0_53, %c0_54] : memref<4x9x9x4xf32, #tpu.memory_space<vmem>>, vector<1x8x8x4xf32>
    %59 = vector.shape_cast %58 : vector<1x8x8x4xf32> to vector<8x8x4xf32>
    %60 = vector.shape_cast %59 : vector<8x8x4xf32> to vector<64x4xf32>
    %61 = arith.truncf %60 : vector<64x4xf32> to vector<64x4xbf16>
    %c3_55 = arith.constant 3 : index
    %c0_56 = arith.constant 0 : index
    %c0_57 = arith.constant 0 : index
    %62 = vector.load %arg4[%c3_55, %c0_56, %c0_57] : memref<9x4x4xbf16, #tpu.memory_space<vmem>>, vector<1x4x4xbf16>
    %63 = vector.shape_cast %62 : vector<1x4x4xbf16> to vector<4x4xbf16>
    %cst_58 = arith.constant dense<0.000000e+00> : vector<64x4xf32>
    %64 = tpu.matmul %61, %63, %cst_58 {dimension_numbers = #tpu.dot_dimension_numbers<[1], [0], [0], [1], [0, 0, 1, 1], [], []>} : vector<64x4xbf16>, vector<4x4xbf16>, vector<64x4xf32> -> vector<64x4xf32>
    %65 = arith.addf %57, %64 : vector<64x4xf32>
    %c3_59 = arith.constant 3 : index
    %c0_60 = arith.constant 0 : index
    %c0_61 = arith.constant 0 : index
    %c0_62 = arith.constant 0 : index
    %66 = vector.load %arg10[%c3_59, %c0_60, %c0_61, %c0_62] : memref<4x9x9x4xf32, #tpu.memory_space<vmem>>, vector<1x8x8x4xf32>
    %67 = vector.shape_cast %66 : vector<1x8x8x4xf32> to vector<8x8x4xf32>
    %68 = vector.shape_cast %67 : vector<8x8x4xf32> to vector<64x4xf32>
    %69 = arith.truncf %68 : vector<64x4xf32> to vector<64x4xbf16>
    %c4 = arith.constant 4 : index
    %c0_63 = arith.constant 0 : index
    %c0_64 = arith.constant 0 : index
    %70 = vector.load %arg4[%c4, %c0_63, %c0_64] : memref<9x4x4xbf16, #tpu.memory_space<vmem>>, vector<1x4x4xbf16>
    %71 = vector.shape_cast %70 : vector<1x4x4xbf16> to vector<4x4xbf16>
    %cst_65 = arith.constant dense<0.000000e+00> : vector<64x4xf32>
    %72 = tpu.matmul %69, %71, %cst_65 {dimension_numbers = #tpu.dot_dimension_numbers<[1], [0], [0], [1], [0, 0, 1, 1], [], []>} : vector<64x4xbf16>, vector<4x4xbf16>, vector<64x4xf32> -> vector<64x4xf32>
    %73 = arith.addf %65, %72 : vector<64x4xf32>
    %c2_66 = arith.constant 2 : index
    %c0_67 = arith.constant 0 : index
    %c1_68 = arith.constant 1 : index
    %c0_69 = arith.constant 0 : index
    %74 = vector.load %arg10[%c2_66, %c0_67, %c1_68, %c0_69] : memref<4x9x9x4xf32, #tpu.memory_space<vmem>>, vector<1x8x8x4xf32>
    %75 = vector.shape_cast %74 : vector<1x8x8x4xf32> to vector<8x8x4xf32>
    %76 = vector.shape_cast %75 : vector<8x8x4xf32> to vector<64x4xf32>
    %77 = arith.truncf %76 : vector<64x4xf32> to vector<64x4xbf16>
    %c5 = arith.constant 5 : index
    %c0_70 = arith.constant 0 : index
    %c0_71 = arith.constant 0 : index
    %78 = vector.load %arg4[%c5, %c0_70, %c0_71] : memref<9x4x4xbf16, #tpu.memory_space<vmem>>, vector<1x4x4xbf16>
    %79 = vector.shape_cast %78 : vector<1x4x4xbf16> to vector<4x4xbf16>
    %cst_72 = arith.constant dense<0.000000e+00> : vector<64x4xf32>
    %80 = tpu.matmul %77, %79, %cst_72 {dimension_numbers = #tpu.dot_dimension_numbers<[1], [0], [0], [1], [0, 0, 1, 1], [], []>} : vector<64x4xbf16>, vector<4x4xbf16>, vector<64x4xf32> -> vector<64x4xf32>
    %81 = arith.addf %73, %80 : vector<64x4xf32>
    %c0_73 = arith.constant 0 : index
    %c1_74 = arith.constant 1 : index
    %c0_75 = arith.constant 0 : index
    %c0_76 = arith.constant 0 : index
    %82 = vector.load %arg10[%c0_73, %c1_74, %c0_75, %c0_76] : memref<4x9x9x4xf32, #tpu.memory_space<vmem>>, vector<1x8x8x4xf32>
    %83 = vector.shape_cast %82 : vector<1x8x8x4xf32> to vector<8x8x4xf32>
    %84 = vector.shape_cast %83 : vector<8x8x4xf32> to vector<64x4xf32>
    %85 = arith.truncf %84 : vector<64x4xf32> to vector<64x4xbf16>
    %c6 = arith.constant 6 : index
    %c0_77 = arith.constant 0 : index
    %c0_78 = arith.constant 0 : index
    %86 = vector.load %arg4[%c6, %c0_77, %c0_78] : memref<9x4x4xbf16, #tpu.memory_space<vmem>>, vector<1x4x4xbf16>
    %87 = vector.shape_cast %86 : vector<1x4x4xbf16> to vector<4x4xbf16>
    %cst_79 = arith.constant dense<0.000000e+00> : vector<64x4xf32>
    %88 = tpu.matmul %85, %87, %cst_79 {dimension_numbers = #tpu.dot_dimension_numbers<[1], [0], [0], [1], [0, 0, 1, 1], [], []>} : vector<64x4xbf16>, vector<4x4xbf16>, vector<64x4xf32> -> vector<64x4xf32>
    %89 = arith.addf %81, %88 : vector<64x4xf32>
    %c1_80 = arith.constant 1 : index
    %c1_81 = arith.constant 1 : index
    %c0_82 = arith.constant 0 : index
    %c0_83 = arith.constant 0 : index
    %90 = vector.load %arg10[%c1_80, %c1_81, %c0_82, %c0_83] : memref<4x9x9x4xf32, #tpu.memory_space<vmem>>, vector<1x8x8x4xf32>
    %91 = vector.shape_cast %90 : vector<1x8x8x4xf32> to vector<8x8x4xf32>
    %92 = vector.shape_cast %91 : vector<8x8x4xf32> to vector<64x4xf32>
    %93 = arith.truncf %92 : vector<64x4xf32> to vector<64x4xbf16>
    %c7 = arith.constant 7 : index
    %c0_84 = arith.constant 0 : index
    %c0_85 = arith.constant 0 : index
    %94 = vector.load %arg4[%c7, %c0_84, %c0_85] : memref<9x4x4xbf16, #tpu.memory_space<vmem>>, vector<1x4x4xbf16>
    %95 = vector.shape_cast %94 : vector<1x4x4xbf16> to vector<4x4xbf16>
    %cst_86 = arith.constant dense<0.000000e+00> : vector<64x4xf32>
    %96 = tpu.matmul %93, %95, %cst_86 {dimension_numbers = #tpu.dot_dimension_numbers<[1], [0], [0], [1], [0, 0, 1, 1], [], []>} : vector<64x4xbf16>, vector<4x4xbf16>, vector<64x4xf32> -> vector<64x4xf32>
    %97 = arith.addf %89, %96 : vector<64x4xf32>
    %c0_87 = arith.constant 0 : index
    %c1_88 = arith.constant 1 : index
    %c1_89 = arith.constant 1 : index
    %c0_90 = arith.constant 0 : index
    %98 = vector.load %arg10[%c0_87, %c1_88, %c1_89, %c0_90] : memref<4x9x9x4xf32, #tpu.memory_space<vmem>>, vector<1x8x8x4xf32>
    %99 = vector.shape_cast %98 : vector<1x8x8x4xf32> to vector<8x8x4xf32>
    %100 = vector.shape_cast %99 : vector<8x8x4xf32> to vector<64x4xf32>
    %101 = arith.truncf %100 : vector<64x4xf32> to vector<64x4xbf16>
    %c8 = arith.constant 8 : index
    %c0_91 = arith.constant 0 : index
    %c0_92 = arith.constant 0 : index
    %102 = vector.load %arg4[%c8, %c0_91, %c0_92] : memref<9x4x4xbf16, #tpu.memory_space<vmem>>, vector<1x4x4xbf16>
    %103 = vector.shape_cast %102 : vector<1x4x4xbf16> to vector<4x4xbf16>
    %cst_93 = arith.constant dense<0.000000e+00> : vector<64x4xf32>
    %104 = tpu.matmul %101, %103, %cst_93 {dimension_numbers = #tpu.dot_dimension_numbers<[1], [0], [0], [1], [0, 0, 1, 1], [], []>} : vector<64x4xbf16>, vector<4x4xbf16>, vector<64x4xf32> -> vector<64x4xf32>
    %105 = arith.addf %97, %104 : vector<64x4xf32>
    %c0_94 = arith.constant 0 : index
    %c0_95 = arith.constant 0 : index
    %106 = vector.load %arg5[%c0_94, %c0_95] : memref<1x4xf32, #tpu.memory_space<vmem>>, vector<1x4xf32>
    %107 = vector.broadcast %106 : vector<1x4xf32> to vector<64x4xf32>
    %108 = arith.addf %105, %107 : vector<64x4xf32>
    %cst_96 = arith.constant 0.000000e+00 : f32
    %109 = vector.broadcast %cst_96 : f32 to vector<64x4xf32>
    %110 = arith.maximumf %108, %109 : vector<64x4xf32>
    %111 = arith.truncf %110 : vector<64x4xf32> to vector<64x4xbf16>
    %c0_97 = arith.constant 0 : index
    %c0_98 = arith.constant 0 : index
    %112 = vector.load %arg6[%c0_97, %c0_98] : memref<4x16xbf16, #tpu.memory_space<vmem>>, vector<4x16xbf16>
    %cst_99 = arith.constant dense<0.000000e+00> : vector<64x16xf32>
    %113 = tpu.matmul %111, %112, %cst_99 {dimension_numbers = #tpu.dot_dimension_numbers<[1], [0], [0], [1], [0, 0, 1, 1], [], []>} : vector<64x4xbf16>, vector<4x16xbf16>, vector<64x16xf32> -> vector<64x16xf32>
    %c0_100 = arith.constant 0 : index
    %c0_101 = arith.constant 0 : index
    %c0_102 = arith.constant 0 : index
    %c0_103 = arith.constant 0 : index
    %114 = vector.load %arg1[%c0_100, %c0_101, %c0_102, %c0_103] : memref<1x4x64x4xbf16, #tpu.memory_space<vmem>>, vector<1x1x64x4xbf16>
    %115 = vector.shape_cast %114 : vector<1x1x64x4xbf16> to vector<64x4xbf16>
    %c0_104 = arith.constant 0 : index
    %c0_105 = arith.constant 0 : index
    %116 = vector.load %arg7[%c0_104, %c0_105] : memref<4x16xbf16, #tpu.memory_space<vmem>>, vector<4x16xbf16>
    %cst_106 = arith.constant dense<0.000000e+00> : vector<64x16xf32>
    %117 = tpu.matmul %115, %116, %cst_106 {dimension_numbers = #tpu.dot_dimension_numbers<[1], [0], [0], [1], [0, 0, 1, 1], [], []>} : vector<64x4xbf16>, vector<4x16xbf16>, vector<64x16xf32> -> vector<64x16xf32>
    %118 = arith.addf %113, %117 : vector<64x16xf32>
    %c0_107 = arith.constant 0 : index
    %c0_108 = arith.constant 0 : index
    %119 = vector.load %arg8[%c0_107, %c0_108] : memref<1x16xf32, #tpu.memory_space<vmem>>, vector<1x16xf32>
    %120 = vector.broadcast %119 : vector<1x16xf32> to vector<64x16xf32>
    %121 = arith.addf %118, %120 : vector<64x16xf32>
    %cst_109 = arith.constant 0.000000e+00 : f32
    %122 = vector.broadcast %cst_109 : f32 to vector<64x16xf32>
    %123 = arith.maximumf %121, %122 : vector<64x16xf32>
    %c0_110 = arith.constant 0 : index
    %c0_111 = arith.constant 0 : index
    %c0_112 = arith.constant 0 : index
    %124 = vector.load %arg9[%c0_110, %c0_111, %c0_112] : memref<1x64x16xf32, #tpu.memory_space<vmem>>, vector<1x64x16xf32>
    %125 = vector.shape_cast %124 : vector<1x64x16xf32> to vector<64x16xf32>
    %126 = vector.shape_cast %123 : vector<64x16xf32> to vector<1x64x16xf32>
    tpu.vector_store %arg9[%c0_110, %c0_111, %c0_112], %126 {strides = array<i32>} : memref<1x64x16xf32, #tpu.memory_space<vmem>>, vector<1x64x16xf32>,
    return
  }
  func.func @transform_0(%arg0: i32) -> (i32, i32, i32, i32) {
    %c0_i32 = arith.constant 0 : i32
    %c0_i32_0 = arith.constant 0 : i32
    %c0_i32_1 = arith.constant 0 : i32
    %c0_i32_2 = arith.constant 0 : i32
    return %arg0, %c0_i32, %c0_i32_0, %c0_i32_1 : i32, i32, i32, i32
  }
  func.func @transform_1(%arg0: i32) -> (i32, i32) {
    %c0_i32 = arith.constant 0 : i32
    %c0_i32_0 = arith.constant 0 : i32
    %c0_i32_1 = arith.constant 0 : i32
    return %c0_i32, %c0_i32_0 : i32, i32
  }
  func.func @transform_2(%arg0: i32) -> (i32, i32) {
    %c0_i32 = arith.constant 0 : i32
    %c0_i32_0 = arith.constant 0 : i32
    %c0_i32_1 = arith.constant 0 : i32
    return %c0_i32, %c0_i32_0 : i32, i32
  }
  func.func @transform_3(%arg0: i32) -> (i32, i32, i32) {
    %c0_i32 = arith.constant 0 : i32
    %c0_i32_0 = arith.constant 0 : i32
    %c0_i32_1 = arith.constant 0 : i32
    %c0_i32_2 = arith.constant 0 : i32
    return %c0_i32, %c0_i32_0, %c0_i32_1 : i32, i32, i32
  }
  func.func @transform_4(%arg0: i32) -> (i32, i32) {
    %c0_i32 = arith.constant 0 : i32
    %c0_i32_0 = arith.constant 0 : i32
    %c0_i32_1 = arith.constant 0 : i32
    return %c0_i32, %c0_i32_0 : i32, i32
  }
  func.func @transform_5(%arg0: i32) -> (i32, i32) {
    %c0_i32 = arith.constant 0 : i32
    %c0_i32_0 = arith.constant 0 : i32
    %c0_i32_1 = arith.constant 0 : i32
    return %c0_i32, %c0_i32_0 : i32, i32
  }
  func.func @transform_6(%arg0: i32) -> (i32, i32) {
    %c0_i32 = arith.constant 0 : i32
    %c0_i32_0 = arith.constant 0 : i32
    %c0_i32_1 = arith.constant 0 : i32
    return %c0_i32, %c0_i32_0 : i32, i32
  }
  func.func @transform_7(%arg0: i32) -> (i32, i32) {
    %c0_i32 = arith.constant 0 : i32
    %c0_i32_0 = arith.constant 0 : i32
    %c0_i32_1 = arith.constant 0 : i32
    return %c0_i32, %c0_i32_0 : i32, i32
  }
  func.func @transform_8(%arg0: i32) -> (i32, i32, i32) {
    %c0_i32 = arith.constant 0 : i32
    %c0_i32_0 = arith.constant 0 : i32
    %c0_i32_1 = arith.constant 0 : i32
    return %arg0, %c0_i32, %c0_i32_0 : i32, i32, i32
  }
}

</mosaic_0001>

<llo_original>
// kernel: bottleneck_forward.1
$region0: #{bottleneck_forward.1}
  #allocation0 [shape = 'u32[]', space=smem, size = 0x4, offset = 0x4, fixed_abs, tag = 'smem constant byte address 0x4 - core index']
  #allocation1 [shape = 'u32[72,128]{1,0:T(1,128)}', space=vmem, size = 0x9000, scoped, tag = 'internal scratch']
  #allocation2 [shape = 'f32[4,9,9,4]{3,2,1,0:T(8,128)}', space=vmem, size = 0x48000, scoped, tag = 'scratch operand']
  %s0 = inlined_call_operand.vmem [shape: bf16[2,4,64,4], index: 0, kind: input, shape index: {}]
  %s1 = inlined_call_operand.vmem [shape: bf16[4,4], index: 1, kind: input, shape index: {}]
  %s2 = inlined_call_operand.vmem [shape: f32[1,4], index: 2, kind: input, shape index: {}]
  %s3 = inlined_call_operand.vmem [shape: bf16[9,4,4], index: 3, kind: input, shape index: {}]
  %s4 = inlined_call_operand.vmem [shape: f32[1,4], index: 4, kind: input, shape index: {}]
  %s5 = inlined_call_operand.vmem [shape: bf16[4,16], index: 5, kind: input, shape index: {}]
  %s6 = inlined_call_operand.vmem [shape: bf16[4,16], index: 6, kind: input, shape index: {}]
  %s7 = inlined_call_operand.vmem [shape: f32[1,16], index: 7, kind: input, shape index: {}]
  %s8 = inlined_call_operand.hbm [shape: f32[2,64,16], index: 8, kind: output, shape index: {}]
  %s9 = sld [smem:[#allocation0]]
  $region65: #{bottleneck_forward.1} parent=0
    _
  %s11 = ssub.s32 1, %s9
  %s12 = scalar_select 0, %s11, %s9
  $region1: #{bottleneck_forward.1} parent=0
    #allocation3 [shape = 'u8[65536]{0}', space=vmem, size = 0x10000, scoped, tag = 'output window, operand 0']
    #allocation4 [shape = 's32[2]{0}', space=sflag, size = 0x8, scoped, tag = 'scoped memory for bottleneck_forward.1']
    %13 = vsyncpa [#allocation4], 0
    %s14 = scalar_lea.sflag [#allocation4], 1
    %15 = vsyncpa %s14, 0
    loop: start=0, step=1, limit=4
    $region2: #{bottleneck_forward.1} parent=1 // loop_pre_header
      _
    $region3: #{bottleneck_forward.1} parent=1 // loop_header
      %s17 = sphi 0, %s21
      %p18 = scmp.ge.s32.totalorder %s17, 4
      %s27 = sphi 0, %s29
      %s30 = sphi 0, %s27
      %s31 = sphi 0, %s30
      %s47 = sphi 0, %s31
      %s51 = sphi 0, %s51
      %s53 = sphi 0, %s51
      %s54 = sphi 0, %s53
      %s68 = sphi 0, %s54
      %s72 = sphi 0, %s72
      %s74 = sphi 0, %s72
      %s75 = sphi 0, %s74
      %s89 = sphi 0, %s75
      %s93 = sphi 0, %s93
      %s95 = sphi 0, %s93
      %s96 = sphi 0, %s95
      %s110 = sphi 0, %s96
      %s114 = sphi 0, %s114
      %s116 = sphi 0, %s114
      %s117 = sphi 0, %s116
      %s131 = sphi 0, %s117
      %s135 = sphi 0, %s135
      %s137 = sphi 0, %s135
      %s138 = sphi 0, %s137
      %s152 = sphi 0, %s138
      %s156 = sphi 0, %s156
      %s158 = sphi 0, %s156
      %s159 = sphi 0, %s158
      %s173 = sphi 0, %s159
      %s177 = sphi 0, %s177
      %s179 = sphi 0, %s177
      %s180 = sphi 0, %s179
      %s194 = sphi 0, %s180
      %s200 = sphi 0, %s202
      %s203 = sphi 0, %s200
      %s204 = sphi 0, %s203
      %s220 = sphi 0, %s204
    $region4: #{bottleneck_forward.1} parent=1 // loop_header_branch
      %20 = sbr.rel (%p18) target = $region8
    $region5: #{bottleneck_forward.1} parent=1 // loop_body
      %s22 = ssub.s32 %s17, 1
      %s23 = ssub.s32 %s17, 2
      %s24 = sadd.s32 %s17, 1
      %s25 = ssub.s32 %s17, %s24
      %p26 = scmp.eq.s32.totalorder %s25, 0
      %s28 = sadd.s32 %s27, 1
      %s29 = scalar_select %p26, %s27, %s28
      %p32 = pneg %p26
      %p33 = scmp.eq.s32.totalorder %s17, 1
      %p34 = por %p32, %p33
      %p35 = scmp.ne.s32.totalorder %s27, %s30
      %p36 = scmp.eq.s32.totalorder %s17, 0
      %p37 = por %p35, %p36
      %p38 = scmp.ne.s32.totalorder %s27, %s30
      %p39 = scmp.eq.s32.totalorder %s22, 1
      %p40 = por %p38, %p39
      %p41 = scmp.ne.s32.totalorder %s30, %s31
      %p42 = scmp.eq.s32.totalorder %s22, 0
      %p43 = por %p41, %p42
      %p44 = scmp.ne.s32.totalorder %s30, %s31
      %p45 = scmp.eq.s32.totalorder %s23, 1
      %p46 = por %p44, %p45
      %p48 = scmp.ne.s32.totalorder %s31, %s47
      %p49 = scmp.eq.s32.totalorder %s23, 0
      %p50 = por %p48, %p49
      %s52 = sadd.s32 %s51, 1
      %p55 = scmp.eq.s32.totalorder %s17, 1
      %p56 = scmp.ne.s32.totalorder %s51, %s53
      %p57 = scmp.eq.s32.totalorder %s17, 0
      %p58 = por %p56, %p57
      %p59 = scmp.ne.s32.totalorder %s51, %s53
      %p60 = scmp.eq.s32.totalorder %s22, 1
      %p61 = por %p59, %p60
      %p62 = scmp.ne.s32.totalorder %s53, %s54
      %p63 = scmp.eq.s32.totalorder %s22, 0
      %p64 = por %p62, %p63
      %p65 = scmp.ne.s32.totalorder %s53, %s54
      %p66 = scmp.eq.s32.totalorder %s23, 1
      %p67 = por %p65, %p66
      %p69 = scmp.ne.s32.totalorder %s54, %s68
      %p70 = scmp.eq.s32.totalorder %s23, 0
      %p71 = por %p69, %p70
      %s73 = sadd.s32 %s72, 1
      %p76 = scmp.eq.s32.totalorder %s17, 1
      %p77 = scmp.ne.s32.totalorder %s72, %s74
      %p78 = scmp.eq.s32.totalorder %s17, 0
      %p79 = por %p77, %p78
      %p80 = scmp.ne.s32.totalorder %s72, %s74
      %p81 = scmp.eq.s32.totalorder %s22, 1
      %p82 = por %p80, %p81
      %p83 = scmp.ne.s32.totalorder %s74, %s75
      %p84 = scmp.eq.s32.totalorder %s22, 0
      %p85 = por %p83, %p84
      %p86 = scmp.ne.s32.totalorder %s74, %s75
      %p87 = scmp.eq.s32.totalorder %s23, 1
      %p88 = por %p86, %p87
      %p90 = scmp.ne.s32.totalorder %s75, %s89
      %p91 = scmp.eq.s32.totalorder %s23, 0
      %p92 = por %p90, %p91
      %s94 = sadd.s32 %s93, 1
      %p97 = scmp.eq.s32.totalorder %s17, 1
      %p98 = scmp.ne.s32.totalorder %s93, %s95
      %p99 = scmp.eq.s32.totalorder %s17, 0
      %p100 = por %p98, %p99
      %p101 = scmp.ne.s32.totalorder %s93, %s95
      %p102 = scmp.eq.s32.totalorder %s22, 1
      %p103 = por %p101, %p102
      %p104 = scmp.ne.s32.totalorder %s95, %s96
      %p105 = scmp.eq.s32.totalorder %s22, 0
      %p106 = por %p104, %p105
      %p107 = scmp.ne.s32.totalorder %s95, %s96
      %p108 = scmp.eq.s32.totalorder %s23, 1
      %p109 = por %p107, %p108
      %p111 = scmp.ne.s32.totalorder %s96, %s110
      %p112 = scmp.eq.s32.totalorder %s23, 0
      %p113 = por %p111, %p112
      %s115 = sadd.s32 %s114, 1
      %p118 = scmp.eq.s32.totalorder %s17, 1
      %p119 = scmp.ne.s32.totalorder %s114, %s116
      %p120 = scmp.eq.s32.totalorder %s17, 0
      %p121 = por %p119, %p120
      %p122 = scmp.ne.s32.totalorder %s114, %s116
      %p123 = scmp.eq.s32.totalorder %s22, 1
      %p124 = por %p122, %p123
      %p125 = scmp.ne.s32.totalorder %s116, %s117
      %p126 = scmp.eq.s32.totalorder %s22, 0
      %p127 = por %p125, %p126
      %p128 = scmp.ne.s32.totalorder %s116, %s117
      %p129 = scmp.eq.s32.totalorder %s23, 1
      %p130 = por %p128, %p129
      %p132 = scmp.ne.s32.totalorder %s117, %s131
      %p133 = scmp.eq.s32.totalorder %s23, 0
      %p134 = por %p132, %p133
      %s136 = sadd.s32 %s135, 1
      %p139 = scmp.eq.s32.totalorder %s17, 1
      %p140 = scmp.ne.s32.totalorder %s135, %s137
      %p141 = scmp.eq.s32.totalorder %s17, 0
      %p142 = por %p140, %p141
      %p143 = scmp.ne.s32.totalorder %s135, %s137
      %p144 = scmp.eq.s32.totalorder %s22, 1
      %p145 = por %p143, %p144
      %p146 = scmp.ne.s32.totalorder %s137, %s138
      %p147 = scmp.eq.s32.totalorder %s22, 0
      %p148 = por %p146, %p147
      %p149 = scmp.ne.s32.totalorder %s137, %s138
      %p150 = scmp.eq.s32.totalorder %s23, 1
      %p151 = por %p149, %p150
      %p153 = scmp.ne.s32.totalorder %s138, %s152
      %p154 = scmp.eq.s32.totalorder %s23, 0
      %p155 = por %p153, %p154
      %s157 = sadd.s32 %s156, 1
      %p160 = scmp.eq.s32.totalorder %s17, 1
      %p161 = scmp.ne.s32.totalorder %s156, %s158
      %p162 = scmp.eq.s32.totalorder %s17, 0
      %p163 = por %p161, %p162
      %p164 = scmp.ne.s32.totalorder %s156, %s158
      %p165 = scmp.eq.s32.totalorder %s22, 1
      %p166 = por %p164, %p165
      %p167 = scmp.ne.s32.totalorder %s158, %s159
      %p168 = scmp.eq.s32.totalorder %s22, 0
      %p169 = por %p167, %p168
      %p170 = scmp.ne.s32.totalorder %s158, %s159
      %p171 = scmp.eq.s32.totalorder %s23, 1
      %p172 = por %p170, %p171
      %p174 = scmp.ne.s32.totalorder %s159, %s173
      %p175 = scmp.eq.s32.totalorder %s23, 0
      %p176 = por %p174, %p175
      %s178 = sadd.s32 %s177, 1
      %p181 = scmp.eq.s32.totalorder %s17, 1
      %p182 = scmp.ne.s32.totalorder %s177, %s179
      %p183 = scmp.eq.s32.totalorder %s17, 0
      %p184 = por %p182, %p183
      %p185 = scmp.ne.s32.totalorder %s177, %s179
      %p186 = scmp.eq.s32.totalorder %s22, 1
      %p187 = por %p185, %p186
      %p188 = scmp.ne.s32.totalorder %s179, %s180
      %p189 = scmp.eq.s32.totalorder %s22, 0
      %p190 = por %p188, %p189
      %p191 = scmp.ne.s32.totalorder %s179, %s180
      %p192 = scmp.eq.s32.totalorder %s23, 1
      %p193 = por %p191, %p192
      %p195 = scmp.ne.s32.totalorder %s180, %s194
      %p196 = scmp.eq.s32.totalorder %s23, 0
      %p197 = por %p195, %p196
      %s198 = ssub.s32 %s17, %s24
      %p199 = scmp.eq.s32.totalorder %s198, 0
      %s201 = sadd.s32 %s200, 1
      %s202 = scalar_select %p199, %s200, %s201
      %p205 = pneg %p199
      %p206 = scmp.eq.s32.totalorder %s17, 1
      %p207 = por %p205, %p206
      %p208 = scmp.ne.s32.totalorder %s200, %s203
      %p209 = scmp.eq.s32.totalorder %s17, 0
      %p210 = por %p208, %p209
      %p211 = scmp.ne.s32.totalorder %s200, %s203
      %p212 = scmp.eq.s32.totalorder %s22, 1
      %p213 = por %p211, %p212
      %p214 = scmp.ne.s32.totalorder %s203, %s204
      %p215 = scmp.eq.s32.totalorder %s22, 0
      %p216 = por %p214, %p215
      %p217 = scmp.ne.s32.totalorder %s203, %s204
      %p218 = scmp.eq.s32.totalorder %s23, 1
      %p219 = por %p217, %p218
      %p221 = scmp.ne.s32.totalorder %s204, %s220
      %p222 = scmp.eq.s32.totalorder %s23, 0
      %p223 = por %p221, %p222
      %p224 = scmp.le.s32.totalorder 1, %s17
      %p225 = scmp.lt.s32.totalorder %s17, 3
      %p226 = pnand %p224, %p225
      %p227 = pneg %p226
      // Predicated region
      $region9: #{bottleneck_forward.1} parent=5 // pred_check
        _
      $region10: #{bottleneck_forward.1} parent=5 // pred_check_branch
        %229 = sbr.rel (%p226) target = $region12
      $region11: #{bottleneck_forward.1} parent=5 // pred_region
        %s230 = ssub.s32 %s17, 1
        // Predicated region
        $region13: #{bottleneck_forward.1} parent=11 // pred_check
          %p231 = pneg %p64
        $region14: #{bottleneck_forward.1} parent=11 // pred_check_branch
          %233 = sbr.rel (%p231) target = $region16
        $region15: #{bottleneck_forward.1} parent=11 // pred_region
          _
        $region16: #{bottleneck_forward.1} parent=11 // pred_fallthru
          _
        // Predicated region
        $region17: #{bottleneck_forward.1} parent=11 // pred_check
          %p234 = pneg %p85
        $region18: #{bottleneck_forward.1} parent=11 // pred_check_branch
          %236 = sbr.rel (%p234) target = $region20
        $region19: #{bottleneck_forward.1} parent=11 // pred_region
          _
        $region20: #{bottleneck_forward.1} parent=11 // pred_fallthru
          _
        // Predicated region
        $region21: #{bottleneck_forward.1} parent=11 // pred_check
          %p237 = pneg %p106
        $region22: #{bottleneck_forward.1} parent=11 // pred_check_branch
          %239 = sbr.rel (%p237) target = $region24
        $region23: #{bottleneck_forward.1} parent=11 // pred_region
          _
        $region24: #{bottleneck_forward.1} parent=11 // pred_fallthru
          _
        // Predicated region
        $region25: #{bottleneck_forward.1} parent=11 // pred_check
          %p240 = pneg %p127
        $region26: #{bottleneck_forward.1} parent=11 // pred_check_branch
          %242 = sbr.rel (%p240) target = $region28
        $region27: #{bottleneck_forward.1} parent=11 // pred_region
          _
        $region28: #{bottleneck_forward.1} parent=11 // pred_fallthru
          _
        // Predicated region
        $region29: #{bottleneck_forward.1} parent=11 // pred_check
          %p243 = pneg %p148
        $region30: #{bottleneck_forward.1} parent=11 // pred_check_branch
          %245 = sbr.rel (%p243) target = $region32
        $region31: #{bottleneck_forward.1} parent=11 // pred_region
          _
        $region32: #{bottleneck_forward.1} parent=11 // pred_fallthru
          _
        // Predicated region
        $region33: #{bottleneck_forward.1} parent=11 // pred_check
          %p246 = pneg %p169
        $region34: #{bottleneck_forward.1} parent=11 // pred_check_branch
          %248 = sbr.rel (%p246) target = $region36
        $region35: #{bottleneck_forward.1} parent=11 // pred_region
          _
        $region36: #{bottleneck_forward.1} parent=11 // pred_fallthru
          _
        // Predicated region
        $region37: #{bottleneck_forward.1} parent=11 // pred_check
          %p249 = pneg %p190
        $region38: #{bottleneck_forward.1} parent=11 // pred_check_branch
          %251 = sbr.rel (%p249) target = $region40
        $region39: #{bottleneck_forward.1} parent=11 // pred_region
          _
        $region40: #{bottleneck_forward.1} parent=11 // pred_fallthru
          _
      $region12: #{bottleneck_forward.1} parent=5 // pred_fallthru
        _
      %p252 = scmp.lt.s32.totalorder %s17, 2
      // Predicated region
      $region41: #{bottleneck_forward.1} parent=5 // pred_check
        %p253 = pneg %p252
      $region42: #{bottleneck_forward.1} parent=5 // pred_check_branch
        %255 = sbr.rel (%p253) target = $region44
      $region43: #{bottleneck_forward.1} parent=5 // pred_region
        // Predicated region
        $region45: #{bottleneck_forward.1} parent=43 // pred_check
          %p256 = pneg %p37
        $region46: #{bottleneck_forward.1} parent=43 // pred_check_branch
          %258 = sbr.rel (%p256) target = $region48
        $region47: #{bottleneck_forward.1} parent=43 // pred_region
          %p259 = scmp.lt.s32.totalorder %s17, 1
          %s260 = scalar_select %p259, %s17, 1
          %s261 = smul.addr %s260, 32
          %s262 = smul.addr %s261, 4
          %s263 = scalar_lea.vmem %s0, %s262
        $region48: #{bottleneck_forward.1} parent=43 // pred_fallthru
          _
      $region44: #{bottleneck_forward.1} parent=5 // pred_fallthru
        _
      %p264 = scmp.le.s32.totalorder 1, %s17
      %p265 = scmp.lt.s32.totalorder %s17, 3
      %p266 = pnand %p264, %p265
      %p267 = pneg %p266
      // Predicated region
      $region49: #{bottleneck_forward.1} parent=5 // pred_check
        _
      $region50: #{bottleneck_forward.1} parent=5 // pred_check_branch
        %269 = sbr.rel (%p266) target = $region52
      $region51: #{bottleneck_forward.1} parent=5 // pred_region
        %s270 = ssub.s32 %s17, 1
        %p271 = scmp.lt.s32.totalorder %s22, 1
        %s272 = scalar_select %p271, %s22, 1
        %s273 = smul.addr %s272, 32
        %s274 = smul.addr %s273, 4
        %s275 = scalar_lea.vmem %s0, %s274
        %p276 = pneg %p43
        %p277 = pneg %p40
        %p278 = pneg %p64
        %p279 = pneg %p61
        %p280 = pneg %p85
        %p281 = pneg %p82
        %p282 = pneg %p106
        %p283 = pneg %p103
        %p284 = pneg %p127
        %p285 = pneg %p124
        %p286 = pneg %p148
        %p287 = pneg %p145
        %p288 = pneg %p169
        %p289 = pneg %p166
        %p290 = pneg %p190
        %p291 = pneg %p187
        %p292 = pneg %p216
        %p293 = pneg %p213
        %s294 = sand.u32 %s203, 1
        %s295 = scalar_lea.sflag [#allocation4], %s294
        %s296 = sand.u32 %s203, 1
        %s297 = smul.addr %s296, 64
        %s298 = scalar_lea.vmem [#allocation3], %s297
        %p299 = scmp.lt.s32.totalorder %s22, 1
        %s300 = scalar_select %p299, %s22, 1
        %s301 = smul.addr %s300, 32
        %s302 = smul.addr %s301, 4
        %s303 = scalar_lea.vmem %s0, %s302
        %v305 = vld [vmem:[%s303] sm:$0xf]
        %v306 = vld [vmem:[%s303 + $0x4] sm:$0xf]
        %v307 = vld [vmem:[%s303 + $0x8] sm:$0xf]
        %v308 = vld [vmem:[%s303 + $0xc] sm:$0xf]
        %v309 = vld [vmem:[%s303 + $0x10] sm:$0xf]
        %v310 = vld [vmem:[%s303 + $0x14] sm:$0xf]
        %v311 = vld [vmem:[%s303 + $0x18] sm:$0xf]
        %v312 = vld [vmem:[%s303 + $0x1c] sm:$0xf]
        %v313 = vld [vmem:[%s303 + $0x20] sm:$0xf]
        %v314 = vld [vmem:[%s303 + $0x24] sm:$0xf]
        %v315 = vld [vmem:[%s303 + $0x28] sm:$0xf]
        %v316 = vld [vmem:[%s303 + $0x2c] sm:$0xf]
        %v317 = vld [vmem:[%s303 + $0x30] sm:$0xf]
        %v318 = vld [vmem:[%s303 + $0x34] sm:$0xf]
        %v319 = vld [vmem:[%s303 + $0x38] sm:$0xf]
        %v320 = vld [vmem:[%s303 + $0x3c] sm:$0xf]
        %v321 = vld [vmem:[%s303 + $0x40] sm:$0xf]
        %v322 = vld [vmem:[%s303 + $0x44] sm:$0xf]
        %v323 = vld [vmem:[%s303 + $0x48] sm:$0xf]
        %v324 = vld [vmem:[%s303 + $0x4c] sm:$0xf]
        %v325 = vld [vmem:[%s303 + $0x50] sm:$0xf]
        %v326 = vld [vmem:[%s303 + $0x54] sm:$0xf]
        %v327 = vld [vmem:[%s303 + $0x58] sm:$0xf]
        %v328 = vld [vmem:[%s303 + $0x5c] sm:$0xf]
        %v329 = vld [vmem:[%s303 + $0x60] sm:$0xf]
        %v330 = vld [vmem:[%s303 + $0x64] sm:$0xf]
        %v331 = vld [vmem:[%s303 + $0x68] sm:$0xf]
        %v332 = vld [vmem:[%s303 + $0x6c] sm:$0xf]
        %v333 = vld [vmem:[%s303 + $0x70] sm:$0xf]
        %v334 = vld [vmem:[%s303 + $0x74] sm:$0xf]
        %v335 = vld [vmem:[%s303 + $0x78] sm:$0xf]
        %v336 = vld [vmem:[%s303 + $0x7c] sm:$0xf]
        %v337 = vld [vmem:[%s1] sm:$0x3]
        %v338 = vld [vmem:[%s2] sm:$0x1]
        %v340 = vperm.slane %v338, 0
        %v374 = vunpack.c.l.b16 %v305
        %v375 = vunpack.c.l.b16 %v306
        %v376 = vunpack.c.l.b16 %v307
        %v377 = vunpack.c.l.b16 %v308
        %v378 = vunpack.c.l.b16 %v309
        %v379 = vunpack.c.l.b16 %v310
        %v380 = vunpack.c.l.b16 %v311
        %v381 = vunpack.c.l.b16 %v312
        %v382 = vunpack.c.l.b16 %v313
        %v383 = vunpack.c.l.b16 %v314
        %v384 = vunpack.c.l.b16 %v315
        %v385 = vunpack.c.l.b16 %v316
        %v386 = vunpack.c.l.b16 %v317
        %v387 = vunpack.c.l.b16 %v318
        %v388 = vunpack.c.l.b16 %v319
        %v389 = vunpack.c.l.b16 %v320
        %v390 = vunpack.c.l.b16 %v321
        %v391 = vunpack.c.l.b16 %v322
        %v392 = vunpack.c.l.b16 %v323
        %v393 = vunpack.c.l.b16 %v324
        %v394 = vunpack.c.l.b16 %v325
        %v395 = vunpack.c.l.b16 %v326
        %v396 = vunpack.c.l.b16 %v327
        %v397 = vunpack.c.l.b16 %v328
        %v398 = vunpack.c.l.b16 %v329
        %v399 = vunpack.c.l.b16 %v330
        %v400 = vunpack.c.l.b16 %v331
        %v401 = vunpack.c.l.b16 %v332
        %v402 = vunpack.c.l.b16 %v333
        %v403 = vunpack.c.l.b16 %v334
        %v404 = vunpack.c.l.b16 %v335
        %v405 = vunpack.c.l.b16 %v336
        %v406 = vpack.c.b16 %v375, %v374
        %v407 = vpack.c.b16 %v377, %v376
        %v408 = vpack.c.b16 %v379, %v378
        %v409 = vpack.c.b16 %v381, %v380
        %v410 = vpack.c.b16 %v383, %v382
        %v411 = vpack.c.b16 %v385, %v384
        %v412 = vpack.c.b16 %v387, %v386
        %v413 = vpack.c.b16 %v389, %v388
        %v414 = vpack.c.b16 %v391, %v390
        %v415 = vpack.c.b16 %v393, %v392
        %v416 = vpack.c.b16 %v395, %v394
        %v417 = vpack.c.b16 %v397, %v396
        %v418 = vpack.c.b16 %v399, %v398
        %v419 = vpack.c.b16 %v401, %v400
        %v420 = vpack.c.b16 %v403, %v402
        %v421 = vpack.c.b16 %v405, %v404
        %vm422 = vcmask 31744
        %v424 = vsel %vm422, %v406, 0
        %v427 = vsel %vm422, %v407, 0
        %v430 = vsel %vm422, %v408, 0
        %v433 = vsel %vm422, %v409, 0
        %v436 = vsel %vm422, %v410, 0
        %v439 = vsel %vm422, %v411, 0
        %v442 = vsel %vm422, %v412, 0
        %v445 = vsel %vm422, %v413, 0
        %v448 = vsel %vm422, %v414, 0
        %v451 = vsel %vm422, %v415, 0
        %v454 = vsel %vm422, %v416, 0
        %v457 = vsel %vm422, %v417, 0
        %v460 = vsel %vm422, %v418, 0
        %v463 = vsel %vm422, %v419, 0
        %v466 = vsel %vm422, %v420, 0
        %v469 = vsel %vm422, %v421, 0
        %vm471 = vcmask 1041408
        %v473 = vsel %vm471, %v337, 0
        %475 = vmatpush.bf16.msra.mxu0 0
        %476 = vmatpush.bf16.msra.mxu0 0
        %477 = vmatpush.bf16.msra.mxu0 0
        %478 = vmatpush.bf16.msra.mxu0 0
        %479 = vmatpush.bf16.msra.mxu0 0
        %480 = vmatpush.bf16.msra.mxu0 0
        %481 = vmatpush.bf16.msra.mxu0 0
        %482 = vmatpush.bf16.msra.mxu0 %v473
        %483 = vmatmul.bf16.gmra.mxu0 %v424
        %v484 = vpop.f32.mrf.mxu0
        %v485 = vadd.f32 %v340, %v484
        %v486 = vpop.f32.mrf.mxu0
        %v487 = vadd.f32 %v340, %v486
        %488 = vmatmul.bf16.gmra.mxu0 %v427
        %v489 = vpop.f32.mrf.mxu0
        %v490 = vadd.f32 %v340, %v489
        %v491 = vpop.f32.mrf.mxu0
        %v492 = vadd.f32 %v340, %v491
        %493 = vmatmul.bf16.gmra.mxu0 %v430
        %v494 = vpop.f32.mrf.mxu0
        %v495 = vadd.f32 %v340, %v494
        %v496 = vpop.f32.mrf.mxu0
        %v497 = vadd.f32 %v340, %v496
        %498 = vmatmul.bf16.gmra.mxu0 %v433
        %v499 = vpop.f32.mrf.mxu0
        %v500 = vadd.f32 %v340, %v499
        %v501 = vpop.f32.mrf.mxu0
        %v502 = vadd.f32 %v340, %v501
        %503 = vmatmul.bf16.gmra.mxu0 %v436
        %v504 = vpop.f32.mrf.mxu0
        %v505 = vadd.f32 %v340, %v504
        %v506 = vpop.f32.mrf.mxu0
        %v507 = vadd.f32 %v340, %v506
        %508 = vmatmul.bf16.gmra.mxu0 %v439
        %v509 = vpop.f32.mrf.mxu0
        %v510 = vadd.f32 %v340, %v509
        %v511 = vpop.f32.mrf.mxu0
        %v512 = vadd.f32 %v340, %v511
        %513 = vmatmul.bf16.gmra.mxu0 %v442
        %v514 = vpop.f32.mrf.mxu0
        %v515 = vadd.f32 %v340, %v514
        %v516 = vpop.f32.mrf.mxu0
        %v517 = vadd.f32 %v340, %v516
        %518 = vmatmul.bf16.gmra.mxu0 %v445
        %v519 = vpop.f32.mrf.mxu0
        %v520 = vadd.f32 %v340, %v519
        %v521 = vpop.f32.mrf.mxu0
        %v522 = vadd.f32 %v340, %v521
        %523 = vmatmul.bf16.gmra.mxu0 %v448
        %v524 = vpop.f32.mrf.mxu0
        %v525 = vadd.f32 %v340, %v524
        %v526 = vpop.f32.mrf.mxu0
        %v527 = vadd.f32 %v340, %v526
        %528 = vmatmul.bf16.gmra.mxu0 %v451
        %v529 = vpop.f32.mrf.mxu0
        %v530 = vadd.f32 %v340, %v529
        %v531 = vpop.f32.mrf.mxu0
        %v532 = vadd.f32 %v340, %v531
        %533 = vmatmul.bf16.gmra.mxu0 %v454
        %v534 = vpop.f32.mrf.mxu0
        %v535 = vadd.f32 %v340, %v534
        %v536 = vpop.f32.mrf.mxu0
        %v537 = vadd.f32 %v340, %v536
        %538 = vmatmul.bf16.gmra.mxu0 %v457
        %v539 = vpop.f32.mrf.mxu0
        %v540 = vadd.f32 %v340, %v539
        %v541 = vpop.f32.mrf.mxu0
        %v542 = vadd.f32 %v340, %v541
        %543 = vmatmul.bf16.gmra.mxu0 %v460
        %v544 = vpop.f32.mrf.mxu0
        %v545 = vadd.f32 %v340, %v544
        %v546 = vpop.f32.mrf.mxu0
        %v547 = vadd.f32 %v340, %v546
        %548 = vmatmul.bf16.gmra.mxu0 %v463
        %v549 = vpop.f32.mrf.mxu0
        %v550 = vadd.f32 %v340, %v549
        %v551 = vpop.f32.mrf.mxu0
        %v552 = vadd.f32 %v340, %v551
        %553 = vmatmul.bf16.gmra.mxu0 %v466
        %v554 = vpop.f32.mrf.mxu0
        %v555 = vadd.f32 %v340, %v554
        %v556 = vpop.f32.mrf.mxu0
        %v557 = vadd.f32 %v340, %v556
        %558 = vmatmul.bf16.gmra.mxu0 %v469
        %v559 = vpop.f32.mrf.mxu0
        %v560 = vadd.f32 %v340, %v559
        %v561 = vpop.f32.mrf.mxu0
        %v562 = vadd.f32 %v340, %v561
        %563 = vdwg.mxu0
        %v564 = vmax.f32 %v485, 0.0
        %v565 = vmax.f32 %v487, 0.0
        %v566 = vmax.f32 %v490, 0.0
        %v567 = vmax.f32 %v492, 0.0
        %v568 = vmax.f32 %v495, 0.0
        %v569 = vmax.f32 %v497, 0.0
        %v570 = vmax.f32 %v500, 0.0
        %v571 = vmax.f32 %v502, 0.0
        %v572 = vmax.f32 %v505, 0.0
        %v573 = vmax.f32 %v507, 0.0
        %v574 = vmax.f32 %v510, 0.0
        %v575 = vmax.f32 %v512, 0.0
        %v576 = vmax.f32 %v515, 0.0
        %v577 = vmax.f32 %v517, 0.0
        %v578 = vmax.f32 %v520, 0.0
        %v579 = vmax.f32 %v522, 0.0
        %v580 = vmax.f32 %v525, 0.0
        %v581 = vmax.f32 %v527, 0.0
        %v582 = vmax.f32 %v530, 0.0
        %v583 = vmax.f32 %v532, 0.0
        %v584 = vmax.f32 %v535, 0.0
        %v585 = vmax.f32 %v537, 0.0
        %v586 = vmax.f32 %v540, 0.0
        %v587 = vmax.f32 %v542, 0.0
        %v588 = vmax.f32 %v545, 0.0
        %v589 = vmax.f32 %v547, 0.0
        %v590 = vmax.f32 %v550, 0.0
        %v591 = vmax.f32 %v552, 0.0
        %v592 = vmax.f32 %v555, 0.0
        %v593 = vmax.f32 %v557, 0.0
        %v594 = vmax.f32 %v560, 0.0
        %v595 = vmax.f32 %v562, 0.0
        %596 = vst.msk [vmem:[#allocation2] sm:$0xff] %vm422, 0.0
        %vm597 = vcmask 24576
        %598 = vst.msk [vmem:[#allocation2 + $0x8] sm:$0x1] %vm597, 0.0
        %599 = vst.msk [vmem:[#allocation2 + $0x10] sm:$0xff] %vm422, 0.0
        %600 = vst.msk [vmem:[#allocation2 + $0x18] sm:$0x1] %vm597, 0.0
        %601 = vst.msk [vmem:[#allocation2 + $0x20] sm:$0xff] %vm422, 0.0
        %602 = vst.msk [vmem:[#allocation2 + $0x28] sm:$0x1] %vm597, 0.0
        %603 = vst.msk [vmem:[#allocation2 + $0x30] sm:$0xff] %vm422, 0.0
        %604 = vst.msk [vmem:[#allocation2 + $0x38] sm:$0x1] %vm597, 0.0
        %605 = vst.msk [vmem:[#allocation2 + $0x40] sm:$0xff] %vm422, 0.0
        %606 = vst.msk [vmem:[#allocation2 + $0x48] sm:$0x1] %vm597, 0.0
        %607 = vst.msk [vmem:[#allocation2 + $0x50] sm:$0xff] %vm422, 0.0
        %608 = vst.msk [vmem:[#allocation2 + $0x58] sm:$0x1] %vm597, 0.0
        %609 = vst.msk [vmem:[#allocation2 + $0x60] sm:$0xff] %vm422, 0.0
        %610 = vst.msk [vmem:[#allocation2 + $0x68] sm:$0x1] %vm597, 0.0
        %611 = vst.msk [vmem:[#allocation2 + $0x70] sm:$0xff] %vm422, 0.0
        %612 = vst.msk [vmem:[#allocation2 + $0x78] sm:$0x1] %vm597, 0.0
        %613 = vst.msk [vmem:[#allocation2 + $0x80] sm:$0xff] %vm422, 0.0
        %614 = vst.msk [vmem:[#allocation2 + $0x88] sm:$0x1] %vm597, 0.0
        %615 = vst.msk [vmem:[#allocation2 + $0x90] sm:$0xff] %vm422, 0.0
        %616 = vst.msk [vmem:[#allocation2 + $0x98] sm:$0x1] %vm597, 0.0
        %617 = vst.msk [vmem:[#allocation2 + $0xa0] sm:$0xff] %vm422, 0.0
        %618 = vst.msk [vmem:[#allocation2 + $0xa8] sm:$0x1] %vm597, 0.0
        %619 = vst.msk [vmem:[#allocation2 + $0xb0] sm:$0xff] %vm422, 0.0
        %620 = vst.msk [vmem:[#allocation2 + $0xb8] sm:$0x1] %vm597, 0.0
        %621 = vst.msk [vmem:[#allocation2 + $0xc0] sm:$0xff] %vm422, 0.0
        %622 = vst.msk [vmem:[#allocation2 + $0xc8] sm:$0x1] %vm597, 0.0
        %623 = vst.msk [vmem:[#allocation2 + $0xd0] sm:$0xff] %vm422, 0.0
        %624 = vst.msk [vmem:[#allocation2 + $0xd8] sm:$0x1] %vm597, 0.0
        %625 = vst.msk [vmem:[#allocation2 + $0xe0] sm:$0xff] %vm422, 0.0
        %626 = vst.msk [vmem:[#allocation2 + $0xe8] sm:$0x1] %vm597, 0.0
        %627 = vst.msk [vmem:[#allocation2 + $0xf0] sm:$0xff] %vm422, 0.0
        %628 = vst.msk [vmem:[#allocation2 + $0xf8] sm:$0x1] %vm597, 0.0
        %629 = vst.msk [vmem:[#allocation2 + $0x100] sm:$0xff] %vm422, 0.0
        %630 = vst.msk [vmem:[#allocation2 + $0x108] sm:$0x1] %vm597, 0.0
        %631 = vst.msk [vmem:[#allocation2 + $0x110] sm:$0xff] %vm422, 0.0
        %632 = vst.msk [vmem:[#allocation2 + $0x118] sm:$0x1] %vm597, 0.0
        %633 = vst.msk [vmem:[#allocation2 + $0x120] sm:$0xff] %vm422, 0.0
        %634 = vst.msk [vmem:[#allocation2 + $0x128] sm:$0x1] %vm597, 0.0
        %635 = vst.msk [vmem:[#allocation2 + $0x130] sm:$0xff] %vm422, 0.0
        %636 = vst.msk [vmem:[#allocation2 + $0x138] sm:$0x1] %vm597, 0.0
        %637 = vst.msk [vmem:[#allocation2 + $0x140] sm:$0xff] %vm422, 0.0
        %638 = vst.msk [vmem:[#allocation2 + $0x148] sm:$0x1] %vm597, 0.0
        %639 = vst.msk [vmem:[#allocation2 + $0x150] sm:$0xff] %vm422, 0.0
        %640 = vst.msk [vmem:[#allocation2 + $0x158] sm:$0x1] %vm597, 0.0
        %641 = vst.msk [vmem:[#allocation2 + $0x160] sm:$0xff] %vm422, 0.0
        %642 = vst.msk [vmem:[#allocation2 + $0x168] sm:$0x1] %vm597, 0.0
        %643 = vst.msk [vmem:[#allocation2 + $0x170] sm:$0xff] %vm422, 0.0
        %644 = vst.msk [vmem:[#allocation2 + $0x178] sm:$0x1] %vm597, 0.0
        %645 = vst.msk [vmem:[#allocation2 + $0x180] sm:$0xff] %vm422, 0.0
        %646 = vst.msk [vmem:[#allocation2 + $0x188] sm:$0x1] %vm597, 0.0
        %647 = vst.msk [vmem:[#allocation2 + $0x190] sm:$0xff] %vm422, 0.0
        %648 = vst.msk [vmem:[#allocation2 + $0x198] sm:$0x1] %vm597, 0.0
        %649 = vst.msk [vmem:[#allocation2 + $0x1a0] sm:$0xff] %vm422, 0.0
        %650 = vst.msk [vmem:[#allocation2 + $0x1a8] sm:$0x1] %vm597, 0.0
        %651 = vst.msk [vmem:[#allocation2 + $0x1b0] sm:$0xff] %vm422, 0.0
        %652 = vst.msk [vmem:[#allocation2 + $0x1b8] sm:$0x1] %vm597, 0.0
        %653 = vst.msk [vmem:[#allocation2 + $0x1c0] sm:$0xff] %vm422, 0.0
        %654 = vst.msk [vmem:[#allocation2 + $0x1c8] sm:$0x1] %vm597, 0.0
        %655 = vst.msk [vmem:[#allocation2 + $0x1d0] sm:$0xff] %vm422, 0.0
        %656 = vst.msk [vmem:[#allocation2 + $0x1d8] sm:$0x1] %vm597, 0.0
        %657 = vst.msk [vmem:[#allocation2 + $0x1e0] sm:$0xff] %vm422, 0.0
        %658 = vst.msk [vmem:[#allocation2 + $0x1e8] sm:$0x1] %vm597, 0.0
        %659 = vst.msk [vmem:[#allocation2 + $0x1f0] sm:$0xff] %vm422, 0.0
        %660 = vst.msk [vmem:[#allocation2 + $0x1f8] sm:$0x1] %vm597, 0.0
        %661 = vst.msk [vmem:[#allocation2 + $0x200] sm:$0xff] %vm422, 0.0
        %662 = vst.msk [vmem:[#allocation2 + $0x208] sm:$0x1] %vm597, 0.0
        %663 = vst.msk [vmem:[#allocation2 + $0x210] sm:$0xff] %vm422, 0.0
        %664 = vst.msk [vmem:[#allocation2 + $0x218] sm:$0x1] %vm597, 0.0
        %665 = vst.msk [vmem:[#allocation2 + $0x220] sm:$0xff] %vm422, 0.0
        %666 = vst.msk [vmem:[#allocation2 + $0x228] sm:$0x1] %vm597, 0.0
        %667 = vst.msk [vmem:[#allocation2 + $0x230] sm:$0xff] %vm422, 0.0
        %668 = vst.msk [vmem:[#allocation2 + $0x238] sm:$0x1] %vm597, 0.0
        %s669 = scalar_lea.vmem [#allocation2], 432
        %670 = vst.msk [vmem:[%s669] sm:$0xff] %vm422, %v564
        %671 = vst.msk [vmem:[%s669 + $0x10] sm:$0xff] %vm422, %v565
        %672 = vst.msk [vmem:[%s669 + $0x20] sm:$0xff] %vm422, %v566
        %673 = vst.msk [vmem:[%s669 + $0x30] sm:$0xff] %vm422, %v567
        %674 = vst.msk [vmem:[%s669 + $0x40] sm:$0xff] %vm422, %v568
        %675 = vst.msk [vmem:[%s669 + $0x50] sm:$0xff] %vm422, %v569
        %676 = vst.msk [vmem:[%s669 + $0x60] sm:$0xff] %vm422, %v570
        %677 = vst.msk [vmem:[%s669 + $0x70] sm:$0xff] %vm422, %v571
        %s678 = scalar_lea.vmem [#allocation2], 288
        %679 = vst.msk [vmem:[%s678 + $0x1] sm:$0xff] %vm422, %v572
        %680 = vst.msk [vmem:[%s678 + $0x11] sm:$0xff] %vm422, %v573
        %681 = vst.msk [vmem:[%s678 + $0x21] sm:$0xff] %vm422, %v574
        %682 = vst.msk [vmem:[%s678 + $0x31] sm:$0xff] %vm422, %v575
        %683 = vst.msk [vmem:[%s678 + $0x41] sm:$0xff] %vm422, %v576
        %684 = vst.msk [vmem:[%s678 + $0x51] sm:$0xff] %vm422, %v577
        %685 = vst.msk [vmem:[%s678 + $0x61] sm:$0xff] %vm422, %v578
        %686 = vst.msk [vmem:[%s678 + $0x71] sm:$0xff] %vm422, %v579
        %s687 = scalar_lea.vmem [#allocation2], 160
        %688 = vst.msk [vmem:[%s687] sm:$0xff] %vm422, %v580
        %689 = vst.msk [vmem:[%s687 + $0x10] sm:$0xff] %vm422, %v581
        %690 = vst.msk [vmem:[%s687 + $0x20] sm:$0xff] %vm422, %v582
        %691 = vst.msk [vmem:[%s687 + $0x30] sm:$0xff] %vm422, %v583
        %692 = vst.msk [vmem:[%s687 + $0x40] sm:$0xff] %vm422, %v584
        %693 = vst.msk [vmem:[%s687 + $0x50] sm:$0xff] %vm422, %v585
        %694 = vst.msk [vmem:[%s687 + $0x60] sm:$0xff] %vm422, %v586
        %695 = vst.msk [vmem:[%s687 + $0x70] sm:$0xff] %vm422, %v587
        %s696 = scalar_lea.vmem [#allocation2], 16
        %697 = vst.msk [vmem:[%s696 + $0x1] sm:$0xff] %vm422, %v588
        %698 = vst.msk [vmem:[%s696 + $0x11] sm:$0xff] %vm422, %v589
        %699 = vst.msk [vmem:[%s696 + $0x21] sm:$0xff] %vm422, %v590
        %700 = vst.msk [vmem:[%s696 + $0x31] sm:$0xff] %vm422, %v591
        %701 = vst.msk [vmem:[%s696 + $0x41] sm:$0xff] %vm422, %v592
        %702 = vst.msk [vmem:[%s696 + $0x51] sm:$0xff] %vm422, %v593
        %703 = vst.msk [vmem:[%s696 + $0x61] sm:$0xff] %vm422, %v594
        %704 = vst.msk [vmem:[%s696 + $0x71] sm:$0xff] %vm422, %v595
        %v705 = vld [vmem:[#allocation2] sm:$0xff]
        %v706 = vld [vmem:[#allocation2 + $0x10] sm:$0xff]
        %v707 = vld [vmem:[#allocation2 + $0x20] sm:$0xff]
        %v708 = vld [vmem:[#allocation2 + $0x30] sm:$0xff]
        %v709 = vld [vmem:[#allocation2 + $0x40] sm:$0xff]
        %v710 = vld [vmem:[#allocation2 + $0x50] sm:$0xff]
        %v711 = vld [vmem:[#allocation2 + $0x60] sm:$0xff]
        %v712 = vld [vmem:[#allocation2 + $0x70] sm:$0xff]
        %v713 = vpack.c.bf16 %v706, %v705
        %v714 = vpack.c.bf16 %v708, %v707
        %v715 = vpack.c.bf16 %v710, %v709
        %v716 = vpack.c.bf16 %v712, %v711
        %v717 = vld [vmem:[%s3] sm:$0x3]
        %s718 = scalar_lea.vmem [#allocation2], 144
        %v719 = vld [vmem:[%s718] sm:$0xff]
        %v720 = vld [vmem:[%s718 + $0x10] sm:$0xff]
        %v721 = vld [vmem:[%s718 + $0x20] sm:$0xff]
        %v722 = vld [vmem:[%s718 + $0x30] sm:$0xff]
        %v723 = vld [vmem:[%s718 + $0x40] sm:$0xff]
        %v724 = vld [vmem:[%s718 + $0x50] sm:$0xff]
        %v725 = vld [vmem:[%s718 + $0x60] sm:$0xff]
        %v726 = vld [vmem:[%s718 + $0x70] sm:$0xff]
        %v727 = vpack.c.bf16 %v720, %v719
        %v728 = vpack.c.bf16 %v722, %v721
        %v729 = vpack.c.bf16 %v724, %v723
        %v730 = vpack.c.bf16 %v726, %v725
        %s731 = scalar_lea.vmem %s3, 2
        %v732 = vld [vmem:[%s731] sm:$0x3]
        %v734 = vsel %vm422, %v727, 0
        %v737 = vsel %vm422, %v728, 0
        %v740 = vsel %vm422, %v729, 0
        %v743 = vsel %vm422, %v730, 0
        %v746 = vsel %vm471, %v732, 0
        %748 = vmatpush.bf16.msra.mxu0 0
        %749 = vmatpush.bf16.msra.mxu0 0
        %750 = vmatpush.bf16.msra.mxu0 0
        %751 = vmatpush.bf16.msra.mxu0 0
        %752 = vmatpush.bf16.msra.mxu0 0
        %753 = vmatpush.bf16.msra.mxu0 0
        %754 = vmatpush.bf16.msra.mxu0 0
        %755 = vmatpush.bf16.msra.mxu0 %v746
        %756 = vmatmul.bf16.gmra.mxu0 %v734
        %v757 = vpop.f32.mrf.mxu0
        %v758 = vadd.f32 0.0, %v757
        %v759 = vpop.f32.mrf.mxu0
        %v760 = vadd.f32 0.0, %v759
        %761 = vmatmul.bf16.gmra.mxu0 %v737
        %v762 = vpop.f32.mrf.mxu0
        %v763 = vadd.f32 0.0, %v762
        %v764 = vpop.f32.mrf.mxu0
        %v765 = vadd.f32 0.0, %v764
        %766 = vmatmul.bf16.gmra.mxu0 %v740
        %v767 = vpop.f32.mrf.mxu0
        %v768 = vadd.f32 0.0, %v767
        %v769 = vpop.f32.mrf.mxu0
        %v770 = vadd.f32 0.0, %v769
        %771 = vmatmul.bf16.gmra.mxu0 %v743
        %v772 = vpop.f32.mrf.mxu0
        %v773 = vadd.f32 0.0, %v772
        %v774 = vpop.f32.mrf.mxu0
        %v775 = vadd.f32 0.0, %v774
        %776 = vdwg.mxu0
        %v778 = vsel %vm422, %v713, 0
        %v781 = vsel %vm422, %v714, 0
        %v784 = vsel %vm422, %v715, 0
        %v787 = vsel %vm422, %v716, 0
        %v790 = vsel %vm471, %v717, 0
        %792 = vmatpush.bf16.msra.mxu0 0
        %793 = vmatpush.bf16.msra.mxu0 0
        %794 = vmatpush.bf16.msra.mxu0 0
        %795 = vmatpush.bf16.msra.mxu0 0
        %796 = vmatpush.bf16.msra.mxu0 0
        %797 = vmatpush.bf16.msra.mxu0 0
        %798 = vmatpush.bf16.msra.mxu0 0
        %799 = vmatpush.bf16.msra.mxu0 %v790
        %800 = vmatmul.bf16.gmra.mxu0 %v778
        %v801 = vpop.f32.mrf.mxu0
        %v802 = vadd.f32 %v758, %v801
        %v803 = vpop.f32.mrf.mxu0
        %v804 = vadd.f32 %v760, %v803
        %805 = vmatmul.bf16.gmra.mxu0 %v781
        %v806 = vpop.f32.mrf.mxu0
        %v807 = vadd.f32 %v763, %v806
        %v808 = vpop.f32.mrf.mxu0
        %v809 = vadd.f32 %v765, %v808
        %810 = vmatmul.bf16.gmra.mxu0 %v784
        %v811 = vpop.f32.mrf.mxu0
        %v812 = vadd.f32 %v768, %v811
        %v813 = vpop.f32.mrf.mxu0
        %v814 = vadd.f32 %v770, %v813
        %815 = vmatmul.bf16.gmra.mxu0 %v787
        %v816 = vpop.f32.mrf.mxu0
        %v817 = vadd.f32 %v773, %v816
        %v818 = vpop.f32.mrf.mxu0
        %v819 = vadd.f32 %v775, %v818
        %820 = vdwg.mxu0
        %v821 = vld [vmem:[#allocation2 + $0x1] sm:$0xff]
        %v822 = vld [vmem:[#allocation2 + $0x11] sm:$0xff]
        %v823 = vld [vmem:[#allocation2 + $0x21] sm:$0xff]
        %v824 = vld [vmem:[#allocation2 + $0x31] sm:$0xff]
        %v825 = vld [vmem:[#allocation2 + $0x41] sm:$0xff]
        %v826 = vld [vmem:[#allocation2 + $0x51] sm:$0xff]
        %v827 = vld [vmem:[#allocation2 + $0x61] sm:$0xff]
        %v828 = vld [vmem:[#allocation2 + $0x71] sm:$0xff]
        %v829 = vpack.c.bf16 %v822, %v821
        %v830 = vpack.c.bf16 %v824, %v823
        %v831 = vpack.c.bf16 %v826, %v825
        %v832 = vpack.c.bf16 %v828, %v827
        %s833 = scalar_lea.vmem %s3, 4
        %v834 = vld [vmem:[%s833] sm:$0x3]
        %v836 = vsel %vm422, %v829, 0
        %v839 = vsel %vm422, %v830, 0
        %v842 = vsel %vm422, %v831, 0
        %v845 = vsel %vm422, %v832, 0
        %v848 = vsel %vm471, %v834, 0
        %850 = vmatpush.bf16.msra.mxu0 0
        %851 = vmatpush.bf16.msra.mxu0 0
        %852 = vmatpush.bf16.msra.mxu0 0
        %853 = vmatpush.bf16.msra.mxu0 0
        %854 = vmatpush.bf16.msra.mxu0 0
        %855 = vmatpush.bf16.msra.mxu0 0
        %856 = vmatpush.bf16.msra.mxu0 0
        %857 = vmatpush.bf16.msra.mxu0 %v848
        %858 = vmatmul.bf16.gmra.mxu0 %v836
        %v859 = vpop.f32.mrf.mxu0
        %v860 = vadd.f32 0.0, %v859
        %v861 = vpop.f32.mrf.mxu0
        %v862 = vadd.f32 0.0, %v861
        %863 = vmatmul.bf16.gmra.mxu0 %v839
        %v864 = vpop.f32.mrf.mxu0
        %v865 = vadd.f32 0.0, %v864
        %v866 = vpop.f32.mrf.mxu0
        %v867 = vadd.f32 0.0, %v866
        %868 = vmatmul.bf16.gmra.mxu0 %v842
        %v869 = vpop.f32.mrf.mxu0
        %v870 = vadd.f32 0.0, %v869
        %v871 = vpop.f32.mrf.mxu0
        %v872 = vadd.f32 0.0, %v871
        %873 = vmatmul.bf16.gmra.mxu0 %v845
        %v874 = vpop.f32.mrf.mxu0
        %v875 = vadd.f32 0.0, %v874
        %v876 = vpop.f32.mrf.mxu0
        %v877 = vadd.f32 0.0, %v876
        %878 = vdwg.mxu0
        %v879 = vadd.f32 %v802, %v860
        %v880 = vadd.f32 %v804, %v862
        %v881 = vadd.f32 %v807, %v865
        %v882 = vadd.f32 %v809, %v867
        %v883 = vadd.f32 %v812, %v870
        %v884 = vadd.f32 %v814, %v872
        %v885 = vadd.f32 %v817, %v875
        %v886 = vadd.f32 %v819, %v877
        %v887 = vld [vmem:[%s678] sm:$0xff]
        %v888 = vld [vmem:[%s678 + $0x10] sm:$0xff]
        %v889 = vld [vmem:[%s678 + $0x20] sm:$0xff]
        %v890 = vld [vmem:[%s678 + $0x30] sm:$0xff]
        %v891 = vld [vmem:[%s678 + $0x40] sm:$0xff]
        %v892 = vld [vmem:[%s678 + $0x50] sm:$0xff]
        %v893 = vld [vmem:[%s678 + $0x60] sm:$0xff]
        %v894 = vld [vmem:[%s678 + $0x70] sm:$0xff]
        %v895 = vpack.c.bf16 %v888, %v887
        %v896 = vpack.c.bf16 %v890, %v889
        %v897 = vpack.c.bf16 %v892, %v891
        %v898 = vpack.c.bf16 %v894, %v893
        %s899 = scalar_lea.vmem %s3, 6
        %v900 = vld [vmem:[%s899] sm:$0x3]
        %v902 = vsel %vm422, %v895, 0
        %v905 = vsel %vm422, %v896, 0
        %v908 = vsel %vm422, %v897, 0
        %v911 = vsel %vm422, %v898, 0
        %v914 = vsel %vm471, %v900, 0
        %916 = vmatpush.bf16.msra.mxu0 0
        %917 = vmatpush.bf16.msra.mxu0 0
        %918 = vmatpush.bf16.msra.mxu0 0
        %919 = vmatpush.bf16.msra.mxu0 0
        %920 = vmatpush.bf16.msra.mxu0 0
        %921 = vmatpush.bf16.msra.mxu0 0
        %922 = vmatpush.bf16.msra.mxu0 0
        %923 = vmatpush.bf16.msra.mxu0 %v914
        %924 = vmatmul.bf16.gmra.mxu0 %v902
        %v925 = vpop.f32.mrf.mxu0
        %v926 = vadd.f32 0.0, %v925
        %v927 = vpop.f32.mrf.mxu0
        %v928 = vadd.f32 0.0, %v927
        %929 = vmatmul.bf16.gmra.mxu0 %v905
        %v930 = vpop.f32.mrf.mxu0
        %v931 = vadd.f32 0.0, %v930
        %v932 = vpop.f32.mrf.mxu0
        %v933 = vadd.f32 0.0, %v932
        %934 = vmatmul.bf16.gmra.mxu0 %v908
        %v935 = vpop.f32.mrf.mxu0
        %v936 = vadd.f32 0.0, %v935
        %v937 = vpop.f32.mrf.mxu0
        %v938 = vadd.f32 0.0, %v937
        %939 = vmatmul.bf16.gmra.mxu0 %v911
        %v940 = vpop.f32.mrf.mxu0
        %v941 = vadd.f32 0.0, %v940
        %v942 = vpop.f32.mrf.mxu0
        %v943 = vadd.f32 0.0, %v942
        %944 = vdwg.mxu0
        %v945 = vadd.f32 %v879, %v926
        %v946 = vadd.f32 %v880, %v928
        %v947 = vadd.f32 %v881, %v931
        %v948 = vadd.f32 %v882, %v933
        %v949 = vadd.f32 %v883, %v936
        %v950 = vadd.f32 %v884, %v938
        %v951 = vadd.f32 %v885, %v941
        %v952 = vadd.f32 %v886, %v943
        %v953 = vld [vmem:[%s669] sm:$0xff]
        %v954 = vld [vmem:[%s669 + $0x10] sm:$0xff]
        %v955 = vld [vmem:[%s669 + $0x20] sm:$0xff]
        %v956 = vld [vmem:[%s669 + $0x30] sm:$0xff]
        %v957 = vld [vmem:[%s669 + $0x40] sm:$0xff]
        %v958 = vld [vmem:[%s669 + $0x50] sm:$0xff]
        %v959 = vld [vmem:[%s669 + $0x60] sm:$0xff]
        %v960 = vld [vmem:[%s669 + $0x70] sm:$0xff]
        %v961 = vpack.c.bf16 %v954, %v953
        %v962 = vpack.c.bf16 %v956, %v955
        %v963 = vpack.c.bf16 %v958, %v957
        %v964 = vpack.c.bf16 %v960, %v959
        %s965 = scalar_lea.vmem %s3, 8
        %v966 = vld [vmem:[%s965] sm:$0x3]
        %v968 = vsel %vm422, %v961, 0
        %v971 = vsel %vm422, %v962, 0
        %v974 = vsel %vm422, %v963, 0
        %v977 = vsel %vm422, %v964, 0
        %v980 = vsel %vm471, %v966, 0
        %982 = vmatpush.bf16.msra.mxu0 0
        %983 = vmatpush.bf16.msra.mxu0 0
        %984 = vmatpush.bf16.msra.mxu0 0
        %985 = vmatpush.bf16.msra.mxu0 0
        %986 = vmatpush.bf16.msra.mxu0 0
        %987 = vmatpush.bf16.msra.mxu0 0
        %988 = vmatpush.bf16.msra.mxu0 0
        %989 = vmatpush.bf16.msra.mxu0 %v980
        %990 = vmatmul.bf16.gmra.mxu0 %v968
        %v991 = vpop.f32.mrf.mxu0
        %v992 = vadd.f32 0.0, %v991
        %v993 = vpop.f32.mrf.mxu0
        %v994 = vadd.f32 0.0, %v993
        %995 = vmatmul.bf16.gmra.mxu0 %v971
        %v996 = vpop.f32.mrf.mxu0
        %v997 = vadd.f32 0.0, %v996
        %v998 = vpop.f32.mrf.mxu0
        %v999 = vadd.f32 0.0, %v998
        %1000 = vmatmul.bf16.gmra.mxu0 %v974
        %v1001 = vpop.f32.mrf.mxu0
        %v1002 = vadd.f32 0.0, %v1001
        %v1003 = vpop.f32.mrf.mxu0
        %v1004 = vadd.f32 0.0, %v1003
        %1005 = vmatmul.bf16.gmra.mxu0 %v977
        %v1006 = vpop.f32.mrf.mxu0
        %v1007 = vadd.f32 0.0, %v1006
        %v1008 = vpop.f32.mrf.mxu0
        %v1009 = vadd.f32 0.0, %v1008
        %1010 = vdwg.mxu0
        %v1011 = vadd.f32 %v945, %v992
        %v1012 = vadd.f32 %v946, %v994
        %v1013 = vadd.f32 %v947, %v997
        %v1014 = vadd.f32 %v948, %v999
        %v1015 = vadd.f32 %v949, %v1002
        %v1016 = vadd.f32 %v950, %v1004
        %v1017 = vadd.f32 %v951, %v1007
        %v1018 = vadd.f32 %v952, %v1009
        %v1019 = vld [vmem:[%s678 + $0x1] sm:$0xff]
        %v1020 = vld [vmem:[%s678 + $0x11] sm:$0xff]
        %v1021 = vld [vmem:[%s678 + $0x21] sm:$0xff]
        %v1022 = vld [vmem:[%s678 + $0x31] sm:$0xff]
        %v1023 = vld [vmem:[%s678 + $0x41] sm:$0xff]
        %v1024 = vld [vmem:[%s678 + $0x51] sm:$0xff]
        %v1025 = vld [vmem:[%s678 + $0x61] sm:$0xff]
        %v1026 = vld [vmem:[%s678 + $0x71] sm:$0xff]
        %v1027 = vpack.c.bf16 %v1020, %v1019
        %v1028 = vpack.c.bf16 %v1022, %v1021
        %v1029 = vpack.c.bf16 %v1024, %v1023
        %v1030 = vpack.c.bf16 %v1026, %v1025
        %s1031 = scalar_lea.vmem %s3, 10
        %v1032 = vld [vmem:[%s1031] sm:$0x3]
        %v1034 = vsel %vm422, %v1027, 0
        %v1037 = vsel %vm422, %v1028, 0
        %v1040 = vsel %vm422, %v1029, 0
        %v1043 = vsel %vm422, %v1030, 0
        %v1046 = vsel %vm471, %v1032, 0
        %1048 = vmatpush.bf16.msra.mxu0 0
        %1049 = vmatpush.bf16.msra.mxu0 0
        %1050 = vmatpush.bf16.msra.mxu0 0
        %1051 = vmatpush.bf16.msra.mxu0 0
        %1052 = vmatpush.bf16.msra.mxu0 0
        %1053 = vmatpush.bf16.msra.mxu0 0
        %1054 = vmatpush.bf16.msra.mxu0 0
        %1055 = vmatpush.bf16.msra.mxu0 %v1046
        %1056 = vmatmul.bf16.gmra.mxu0 %v1034
        %v1057 = vpop.f32.mrf.mxu0
        %v1058 = vadd.f32 0.0, %v1057
        %v1059 = vpop.f32.mrf.mxu0
        %v1060 = vadd.f32 0.0, %v1059
        %1061 = vmatmul.bf16.gmra.mxu0 %v1037
        %v1062 = vpop.f32.mrf.mxu0
        %v1063 = vadd.f32 0.0, %v1062
        %v1064 = vpop.f32.mrf.mxu0
        %v1065 = vadd.f32 0.0, %v1064
        %1066 = vmatmul.bf16.gmra.mxu0 %v1040
        %v1067 = vpop.f32.mrf.mxu0
        %v1068 = vadd.f32 0.0, %v1067
        %v1069 = vpop.f32.mrf.mxu0
        %v1070 = vadd.f32 0.0, %v1069
        %1071 = vmatmul.bf16.gmra.mxu0 %v1043
        %v1072 = vpop.f32.mrf.mxu0
        %v1073 = vadd.f32 0.0, %v1072
        %v1074 = vpop.f32.mrf.mxu0
        %v1075 = vadd.f32 0.0, %v1074
        %1076 = vdwg.mxu0
        %v1077 = vadd.f32 %v1011, %v1058
        %v1078 = vadd.f32 %v1012, %v1060
        %v1079 = vadd.f32 %v1013, %v1063
        %v1080 = vadd.f32 %v1014, %v1065
        %v1081 = vadd.f32 %v1015, %v1068
        %v1082 = vadd.f32 %v1016, %v1070
        %v1083 = vadd.f32 %v1017, %v1073
        %v1084 = vadd.f32 %v1018, %v1075
        %v1085 = vld [vmem:[%s696] sm:$0xff]
        %v1086 = vld [vmem:[%s696 + $0x10] sm:$0xff]
        %v1087 = vld [vmem:[%s696 + $0x20] sm:$0xff]
        %v1088 = vld [vmem:[%s696 + $0x30] sm:$0xff]
        %v1089 = vld [vmem:[%s696 + $0x40] sm:$0xff]
        %v1090 = vld [vmem:[%s696 + $0x50] sm:$0xff]
        %v1091 = vld [vmem:[%s696 + $0x60] sm:$0xff]
        %v1092 = vld [vmem:[%s696 + $0x70] sm:$0xff]
        %v1093 = vpack.c.bf16 %v1086, %v1085
        %v1094 = vpack.c.bf16 %v1088, %v1087
        %v1095 = vpack.c.bf16 %v1090, %v1089
        %v1096 = vpack.c.bf16 %v1092, %v1091
        %s1097 = scalar_lea.vmem %s3, 12
        %v1098 = vld [vmem:[%s1097] sm:$0x3]
        %v1100 = vsel %vm422, %v1093, 0
        %v1103 = vsel %vm422, %v1094, 0
        %v1106 = vsel %vm422, %v1095, 0
        %v1109 = vsel %vm422, %v1096, 0
        %v1112 = vsel %vm471, %v1098, 0
        %1114 = vmatpush.bf16.msra.mxu0 0
        %1115 = vmatpush.bf16.msra.mxu0 0
        %1116 = vmatpush.bf16.msra.mxu0 0
        %1117 = vmatpush.bf16.msra.mxu0 0
        %1118 = vmatpush.bf16.msra.mxu0 0
        %1119 = vmatpush.bf16.msra.mxu0 0
        %1120 = vmatpush.bf16.msra.mxu0 0
        %1121 = vmatpush.bf16.msra.mxu0 %v1112
        %1122 = vmatmul.bf16.gmra.mxu0 %v1100
        %v1123 = vpop.f32.mrf.mxu0
        %v1124 = vadd.f32 0.0, %v1123
        %v1125 = vpop.f32.mrf.mxu0
        %v1126 = vadd.f32 0.0, %v1125
        %1127 = vmatmul.bf16.gmra.mxu0 %v1103
        %v1128 = vpop.f32.mrf.mxu0
        %v1129 = vadd.f32 0.0, %v1128
        %v1130 = vpop.f32.mrf.mxu0
        %v1131 = vadd.f32 0.0, %v1130
        %1132 = vmatmul.bf16.gmra.mxu0 %v1106
        %v1133 = vpop.f32.mrf.mxu0
        %v1134 = vadd.f32 0.0, %v1133
        %v1135 = vpop.f32.mrf.mxu0
        %v1136 = vadd.f32 0.0, %v1135
        %1137 = vmatmul.bf16.gmra.mxu0 %v1109
        %v1138 = vpop.f32.mrf.mxu0
        %v1139 = vadd.f32 0.0, %v1138
        %v1140 = vpop.f32.mrf.mxu0
        %v1141 = vadd.f32 0.0, %v1140
        %1142 = vdwg.mxu0
        %v1143 = vadd.f32 %v1077, %v1124
        %v1144 = vadd.f32 %v1078, %v1126
        %v1145 = vadd.f32 %v1079, %v1129
        %v1146 = vadd.f32 %v1080, %v1131
        %v1147 = vadd.f32 %v1081, %v1134
        %v1148 = vadd.f32 %v1082, %v1136
        %v1149 = vadd.f32 %v1083, %v1139
        %v1150 = vadd.f32 %v1084, %v1141
        %v1151 = vld [vmem:[%s687] sm:$0xff]
        %v1152 = vld [vmem:[%s687 + $0x10] sm:$0xff]
        %v1153 = vld [vmem:[%s687 + $0x20] sm:$0xff]
        %v1154 = vld [vmem:[%s687 + $0x30] sm:$0xff]
        %v1155 = vld [vmem:[%s687 + $0x40] sm:$0xff]
        %v1156 = vld [vmem:[%s687 + $0x50] sm:$0xff]
        %v1157 = vld [vmem:[%s687 + $0x60] sm:$0xff]
        %v1158 = vld [vmem:[%s687 + $0x70] sm:$0xff]
        %v1159 = vpack.c.bf16 %v1152, %v1151
        %v1160 = vpack.c.bf16 %v1154, %v1153
        %v1161 = vpack.c.bf16 %v1156, %v1155
        %v1162 = vpack.c.bf16 %v1158, %v1157
        %s1163 = scalar_lea.vmem %s3, 14
        %v1164 = vld [vmem:[%s1163] sm:$0x3]
        %v1166 = vsel %vm422, %v1159, 0
        %v1169 = vsel %vm422, %v1160, 0
        %v1172 = vsel %vm422, %v1161, 0
        %v1175 = vsel %vm422, %v1162, 0
        %v1178 = vsel %vm471, %v1164, 0
        %1180 = vmatpush.bf16.msra.mxu0 0
        %1181 = vmatpush.bf16.msra.mxu0 0
        %1182 = vmatpush.bf16.msra.mxu0 0
        %1183 = vmatpush.bf16.msra.mxu0 0
        %1184 = vmatpush.bf16.msra.mxu0 0
        %1185 = vmatpush.bf16.msra.mxu0 0
        %1186 = vmatpush.bf16.msra.mxu0 0
        %1187 = vmatpush.bf16.msra.mxu0 %v1178
        %1188 = vmatmul.bf16.gmra.mxu0 %v1166
        %v1189 = vpop.f32.mrf.mxu0
        %v1190 = vadd.f32 0.0, %v1189
        %v1191 = vpop.f32.mrf.mxu0
        %v1192 = vadd.f32 0.0, %v1191
        %1193 = vmatmul.bf16.gmra.mxu0 %v1169
        %v1194 = vpop.f32.mrf.mxu0
        %v1195 = vadd.f32 0.0, %v1194
        %v1196 = vpop.f32.mrf.mxu0
        %v1197 = vadd.f32 0.0, %v1196
        %1198 = vmatmul.bf16.gmra.mxu0 %v1172
        %v1199 = vpop.f32.mrf.mxu0
        %v1200 = vadd.f32 0.0, %v1199
        %v1201 = vpop.f32.mrf.mxu0
        %v1202 = vadd.f32 0.0, %v1201
        %1203 = vmatmul.bf16.gmra.mxu0 %v1175
        %v1204 = vpop.f32.mrf.mxu0
        %v1205 = vadd.f32 0.0, %v1204
        %v1206 = vpop.f32.mrf.mxu0
        %v1207 = vadd.f32 0.0, %v1206
        %1208 = vdwg.mxu0
        %v1209 = vadd.f32 %v1143, %v1190
        %v1210 = vadd.f32 %v1144, %v1192
        %v1211 = vadd.f32 %v1145, %v1195
        %v1212 = vadd.f32 %v1146, %v1197
        %v1213 = vadd.f32 %v1147, %v1200
        %v1214 = vadd.f32 %v1148, %v1202
        %v1215 = vadd.f32 %v1149, %v1205
        %v1216 = vadd.f32 %v1150, %v1207
        %v1217 = vld [vmem:[%s696 + $0x1] sm:$0xff]
        %v1218 = vld [vmem:[%s696 + $0x11] sm:$0xff]
        %v1219 = vld [vmem:[%s696 + $0x21] sm:$0xff]
        %v1220 = vld [vmem:[%s696 + $0x31] sm:$0xff]
        %v1221 = vld [vmem:[%s696 + $0x41] sm:$0xff]
        %v1222 = vld [vmem:[%s696 + $0x51] sm:$0xff]
        %v1223 = vld [vmem:[%s696 + $0x61] sm:$0xff]
        %v1224 = vld [vmem:[%s696 + $0x71] sm:$0xff]
        %v1225 = vpack.c.bf16 %v1218, %v1217
        %v1226 = vpack.c.bf16 %v1220, %v1219
        %v1227 = vpack.c.bf16 %v1222, %v1221
        %v1228 = vpack.c.bf16 %v1224, %v1223
        %s1229 = scalar_lea.vmem %s3, 16
        %v1230 = vld [vmem:[%s1229] sm:$0x3]
        %v1232 = vsel %vm422, %v1225, 0
        %v1235 = vsel %vm422, %v1226, 0
        %v1238 = vsel %vm422, %v1227, 0
        %v1241 = vsel %vm422, %v1228, 0
        %v1244 = vsel %vm471, %v1230, 0
        %1246 = vmatpush.bf16.msra.mxu0 0
        %1247 = vmatpush.bf16.msra.mxu0 0
        %1248 = vmatpush.bf16.msra.mxu0 0
        %1249 = vmatpush.bf16.msra.mxu0 0
        %1250 = vmatpush.bf16.msra.mxu0 0
        %1251 = vmatpush.bf16.msra.mxu0 0
        %1252 = vmatpush.bf16.msra.mxu0 0
        %1253 = vmatpush.bf16.msra.mxu0 %v1244
        %1254 = vmatmul.bf16.gmra.mxu0 %v1232
        %v1255 = vpop.f32.mrf.mxu0
        %v1256 = vadd.f32 0.0, %v1255
        %v1257 = vpop.f32.mrf.mxu0
        %v1258 = vadd.f32 0.0, %v1257
        %1259 = vmatmul.bf16.gmra.mxu0 %v1235
        %v1260 = vpop.f32.mrf.mxu0
        %v1261 = vadd.f32 0.0, %v1260
        %v1262 = vpop.f32.mrf.mxu0
        %v1263 = vadd.f32 0.0, %v1262
        %1264 = vmatmul.bf16.gmra.mxu0 %v1238
        %v1265 = vpop.f32.mrf.mxu0
        %v1266 = vadd.f32 0.0, %v1265
        %v1267 = vpop.f32.mrf.mxu0
        %v1268 = vadd.f32 0.0, %v1267
        %1269 = vmatmul.bf16.gmra.mxu0 %v1241
        %v1270 = vpop.f32.mrf.mxu0
        %v1271 = vadd.f32 0.0, %v1270
        %v1272 = vpop.f32.mrf.mxu0
        %v1273 = vadd.f32 0.0, %v1272
        %1274 = vdwg.mxu0
        %v1275 = vadd.f32 %v1209, %v1256
        %v1276 = vadd.f32 %v1210, %v1258
        %v1277 = vadd.f32 %v1211, %v1261
        %v1278 = vadd.f32 %v1212, %v1263
        %v1279 = vadd.f32 %v1213, %v1266
        %v1280 = vadd.f32 %v1214, %v1268
        %v1281 = vadd.f32 %v1215, %v1271
        %v1282 = vadd.f32 %v1216, %v1273
        %v1283 = vld [vmem:[%s4] sm:$0x1]
        %v1285 = vperm.slane %v1283, 0
        %v1287 = vadd.f32 %v1275, %v1285
        %v1288 = vadd.f32 %v1276, %v1285
        %v1289 = vadd.f32 %v1277, %v1285
        %v1290 = vadd.f32 %v1278, %v1285
        %v1291 = vadd.f32 %v1279, %v1285
        %v1292 = vadd.f32 %v1280, %v1285
        %v1293 = vadd.f32 %v1281, %v1285
        %v1294 = vadd.f32 %v1282, %v1285
        %v1295 = vmax.f32 %v1287, 0.0
        %v1296 = vmax.f32 %v1288, 0.0
        %v1297 = vmax.f32 %v1289, 0.0
        %v1298 = vmax.f32 %v1290, 0.0
        %v1299 = vmax.f32 %v1291, 0.0
        %v1300 = vmax.f32 %v1292, 0.0
        %v1301 = vmax.f32 %v1293, 0.0
        %v1302 = vmax.f32 %v1294, 0.0
        %v1303 = vpack.c.bf16 %v1296, %v1295
        %v1304 = vpack.c.bf16 %v1298, %v1297
        %v1305 = vpack.c.bf16 %v1300, %v1299
        %v1306 = vpack.c.bf16 %v1302, %v1301
        %v1307 = vld [vmem:[%s5] sm:$0x3]
        %v1308 = vld [vmem:[%s303] sm:$0xf]
        %v1309 = vld [vmem:[%s303 + $0x4] sm:$0xf]
        %v1310 = vld [vmem:[%s303 + $0x8] sm:$0xf]
        %v1311 = vld [vmem:[%s303 + $0xc] sm:$0xf]
        %v1312 = vld [vmem:[%s303 + $0x10] sm:$0xf]
        %v1313 = vld [vmem:[%s303 + $0x14] sm:$0xf]
        %v1314 = vld [vmem:[%s303 + $0x18] sm:$0xf]
        %v1315 = vld [vmem:[%s303 + $0x1c] sm:$0xf]
        %v1316 = vld [vmem:[%s6] sm:$0x3]
        %v1325 = vunpack.c.l.b16 %v1308
        %v1326 = vunpack.c.l.b16 %v1309
        %v1327 = vunpack.c.l.b16 %v1310
        %v1328 = vunpack.c.l.b16 %v1311
        %v1329 = vunpack.c.l.b16 %v1312
        %v1330 = vunpack.c.l.b16 %v1313
        %v1331 = vunpack.c.l.b16 %v1314
        %v1332 = vunpack.c.l.b16 %v1315
        %v1333 = vpack.c.b16 %v1326, %v1325
        %v1334 = vpack.c.b16 %v1328, %v1327
        %v1335 = vpack.c.b16 %v1330, %v1329
        %v1336 = vpack.c.b16 %v1332, %v1331
        %v1338 = vsel %vm422, %v1333, 0
        %v1341 = vsel %vm422, %v1334, 0
        %v1344 = vsel %vm422, %v1335, 0
        %v1347 = vsel %vm422, %v1336, 0
        %v1350 = vsel %vm471, %v1316, 0
        %1352 = vmatpush.bf16.msra.mxu0 0
        %1353 = vmatpush.bf16.msra.mxu0 0
        %1354 = vmatpush.bf16.msra.mxu0 0
        %1355 = vmatpush.bf16.msra.mxu0 0
        %1356 = vmatpush.bf16.msra.mxu0 0
        %1357 = vmatpush.bf16.msra.mxu0 0
        %1358 = vmatpush.bf16.msra.mxu0 0
        %1359 = vmatpush.bf16.msra.mxu0 %v1350
        %1360 = vmatmul.bf16.gmra.mxu0 %v1338
        %v1361 = vpop.f32.mrf.mxu0
        %v1362 = vadd.f32 0.0, %v1361
        %v1363 = vpop.f32.mrf.mxu0
        %v1364 = vadd.f32 0.0, %v1363
        %1365 = vmatmul.bf16.gmra.mxu0 %v1341
        %v1366 = vpop.f32.mrf.mxu0
        %v1367 = vadd.f32 0.0, %v1366
        %v1368 = vpop.f32.mrf.mxu0
        %v1369 = vadd.f32 0.0, %v1368
        %1370 = vmatmul.bf16.gmra.mxu0 %v1344
        %v1371 = vpop.f32.mrf.mxu0
        %v1372 = vadd.f32 0.0, %v1371
        %v1373 = vpop.f32.mrf.mxu0
        %v1374 = vadd.f32 0.0, %v1373
        %1375 = vmatmul.bf16.gmra.mxu0 %v1347
        %v1376 = vpop.f32.mrf.mxu0
        %v1377 = vadd.f32 0.0, %v1376
        %v1378 = vpop.f32.mrf.mxu0
        %v1379 = vadd.f32 0.0, %v1378
        %1380 = vdwg.mxu0
        %v1382 = vsel %vm422, %v1303, 0
        %v1385 = vsel %vm422, %v1304, 0
        %v1388 = vsel %vm422, %v1305, 0
        %v1391 = vsel %vm422, %v1306, 0
        %v1394 = vsel %vm471, %v1307, 0
        %1396 = vmatpush.bf16.msra.mxu0 0
        %1397 = vmatpush.bf16.msra.mxu0 0
        %1398 = vmatpush.bf16.msra.mxu0 0
        %1399 = vmatpush.bf16.msra.mxu0 0
        %1400 = vmatpush.bf16.msra.mxu0 0
        %1401 = vmatpush.bf16.msra.mxu0 0
        %1402 = vmatpush.bf16.msra.mxu0 0
        %1403 = vmatpush.bf16.msra.mxu0 %v1394
        %1404 = vmatmul.bf16.gmra.mxu0 %v1382
        %v1405 = vpop.f32.mrf.mxu0
        %v1406 = vadd.f32 %v1362, %v1405
        %v1407 = vpop.f32.mrf.mxu0
        %v1408 = vadd.f32 %v1364, %v1407
        %1409 = vmatmul.bf16.gmra.mxu0 %v1385
        %v1410 = vpop.f32.mrf.mxu0
        %v1411 = vadd.f32 %v1367, %v1410
        %v1412 = vpop.f32.mrf.mxu0
        %v1413 = vadd.f32 %v1369, %v1412
        %1414 = vmatmul.bf16.gmra.mxu0 %v1388
        %v1415 = vpop.f32.mrf.mxu0
        %v1416 = vadd.f32 %v1372, %v1415
        %v1417 = vpop.f32.mrf.mxu0
        %v1418 = vadd.f32 %v1374, %v1417
        %1419 = vmatmul.bf16.gmra.mxu0 %v1391
        %v1420 = vpop.f32.mrf.mxu0
        %v1421 = vadd.f32 %v1377, %v1420
        %v1422 = vpop.f32.mrf.mxu0
        %v1423 = vadd.f32 %v1379, %v1422
        %1424 = vdwg.mxu0
        %v1425 = vld [vmem:[%s7] sm:$0x1]
        %v1427 = vperm.slane %v1425, 0
        %v1429 = vadd.f32 %v1406, %v1427
        %v1430 = vadd.f32 %v1408, %v1427
        %v1431 = vadd.f32 %v1411, %v1427
        %v1432 = vadd.f32 %v1413, %v1427
        %v1433 = vadd.f32 %v1416, %v1427
        %v1434 = vadd.f32 %v1418, %v1427
        %v1435 = vadd.f32 %v1421, %v1427
        %v1436 = vadd.f32 %v1423, %v1427
        %v1437 = vmax.f32 %v1429, 0.0
        %v1438 = vmax.f32 %v1430, 0.0
        %v1439 = vmax.f32 %v1431, 0.0
        %v1440 = vmax.f32 %v1432, 0.0
        %v1441 = vmax.f32 %v1433, 0.0
        %v1442 = vmax.f32 %v1434, 0.0
        %v1443 = vmax.f32 %v1435, 0.0
        %v1444 = vmax.f32 %v1436, 0.0
        %vm1445 = vcmask 130048
        %1446 = vst.msk [vmem:[%s298] sm:$0xff] %vm1445, %v1437
        %1447 = vst.msk [vmem:[%s298 + $0x8] sm:$0xff] %vm1445, %v1438
        %1448 = vst.msk [vmem:[%s298 + $0x10] sm:$0xff] %vm1445, %v1439
        %1449 = vst.msk [vmem:[%s298 + $0x18] sm:$0xff] %vm1445, %v1440
        %1450 = vst.msk [vmem:[%s298 + $0x20] sm:$0xff] %vm1445, %v1441
        %1451 = vst.msk [vmem:[%s298 + $0x28] sm:$0xff] %vm1445, %v1442
        %1452 = vst.msk [vmem:[%s298 + $0x30] sm:$0xff] %vm1445, %v1443
        %1453 = vst.msk [vmem:[%s298 + $0x38] sm:$0xff] %vm1445, %v1444
        %s1454 = sand.u32 %s203, 1
        %s1455 = scalar_lea.sflag [#allocation4], %s1454
        %s1456 = sand.u32 %s203, 1
        %s1457 = smul.addr %s1456, 64
        %s1458 = scalar_lea.vmem [#allocation3], %s1457
        // Predicated region
        $region53: #{bottleneck_forward.1} parent=51 // pred_check
          %p1459 = pneg %p213
        $region54: #{bottleneck_forward.1} parent=51 // pred_check_branch
          %1461 = sbr.rel (%p1459) target = $region56
        $region55: #{bottleneck_forward.1} parent=51 // pred_region
          %1463 = vsyncadd %s1455, 0
          %s1464 = smul.addr %s22, 8
          %s1465 = smul.addr %s1464, 8
          %s1466 = scalar_lea.hbm %s8, %s1465
          %s1467 = sshll.u32 %s1458, 4
          %s1468 = int_to_ptr.vmem [resolvable:$true] %s1467
          %s1469 = sshll.u32 %s1466, 4
          %s1470 = int_to_ptr.hbm [resolvable:$true] %s1469
          %1475 = dma.vmem_to_hbm [thread:$0]  %s1468, 1024, %s1470, %s1455, 128, 128, 8
        $region56: #{bottleneck_forward.1} parent=51 // pred_fallthru
          _
      $region52: #{bottleneck_forward.1} parent=5 // pred_fallthru
        _
      %p1476 = scmp.le.s32.totalorder 2, %s17
      // Predicated region
      $region57: #{bottleneck_forward.1} parent=5 // pred_check
        %p1477 = pneg %p1476
      $region58: #{bottleneck_forward.1} parent=5 // pred_check_branch
        %1479 = sbr.rel (%p1477) target = $region60
      $region59: #{bottleneck_forward.1} parent=5 // pred_region
        %s1480 = ssub.s32 %s17, 2
        // Predicated region
        $region61: #{bottleneck_forward.1} parent=59 // pred_check
          %p1481 = pneg %p219
        $region62: #{bottleneck_forward.1} parent=59 // pred_check_branch
          %1483 = sbr.rel (%p1481) target = $region64
        $region63: #{bottleneck_forward.1} parent=59 // pred_region
          %s1484 = sand.u32 %s204, 1
          %s1485 = scalar_lea.sflag [#allocation4], %s1484
          %s1486 = sand.u32 %s204, 1
          %s1487 = smul.addr %s1486, 64
          %s1488 = scalar_lea.vmem [#allocation3], %s1487
          %1490 = dma.done %s1485, 1024
        $region64: #{bottleneck_forward.1} parent=59 // pred_fallthru
          _
      $region60: #{bottleneck_forward.1} parent=5 // pred_fallthru
        _
    $region6: #{bottleneck_forward.1} parent=1 // loop_footer
      %s21 = sadd.s32 1, %s17
    $region7: #{bottleneck_forward.1} parent=1 // loop_footer_branch
      %16 = sbr.rel target = $region3
    $region8: #{bottleneck_forward.1} parent=1 // loop_exit
      _
    %1491 = vsyncpa [#allocation4], 1
    %s1492 = scalar_lea.sflag [#allocation4], 1
    %1493 = vsyncpa %s1492, 1

</llo_original>
